<compile_context>
chip_gen: v5e
topology: v5e:2x2
jax: 0.10.0
libtpu: 0.0.40
codegen_flags: <defaults>
</compile_context>

<pallas_src>
import jax
import jax.numpy as jnp
from jax import lax
from jax.experimental import pallas as pl
from jax.experimental.pallas import tpu as pltpu

C_IN = 768
REDUCTION = 4
C_MID = C_IN // REDUCTION  # 192
ALPHA = 0.05


def _adapter_kernel(feat_ref, w1_ref, w2_ref, b2_ref, text_ref,
                    feat_out_ref, pred_ref):
    # feat_ref:     (1, TILE_N, C)     compute dtype (bf16 by default)
    # w1_ref:       (C, C_MID)         Linear1 weight, transposed (no bias)
    # w2_ref:       (C_MID, C)         Linear2 weight, transposed
    # b2_ref:       (1, C)             Linear2 bias (f32)
    # text_ref:     (K_pad, C)         text_feature, zero-padded along K
    # feat_out_ref: (1, TILE_N, C)     f32
    # pred_ref:     (1, K_pad, TILE_N) f32
    x = feat_ref[0]                                                   # (TILE_N, C)
    h = jnp.dot(x, w1_ref[...], preferred_element_type=jnp.float32)   # (TILE_N, C_MID)
    f2 = jnp.dot(h.astype(w2_ref.dtype), w2_ref[...],
                 preferred_element_type=jnp.float32) + b2_ref[...]    # (TILE_N, C)
    y = f2 * (1.0 - ALPHA) + x.astype(jnp.float32) * ALPHA            # f32 residual blend
    feat_out_ref[0] = y.astype(feat_out_ref.dtype)
    # pred tile in (K, N) layout: text (K_pad, C) . y (TILE_N, C), contracting C.
    pred = lax.dot_general(
        text_ref[...], y.astype(text_ref.dtype),
        dimension_numbers=(((1,), (1,)), ((), ())),
        preferred_element_type=jnp.float32)                           # (K_pad, TILE_N)
    pred_ref[0] = pred


def _round_up(x, m):
    return ((x + m - 1) // m) * m


def _pick_token_tile(n, tile_n):
    """Pick a TILE_N and padded N that keep blocks aligned with little waste."""
    n_pad8 = _round_up(n, 8)
    if n_pad8 <= tile_n:
        # Single tile along N; block equals the full (padded) dim, so the
        # (8,128) constraint is satisfied by "equals full array dim".
        return n_pad8, n_pad8
    num_tiles = pl.cdiv(n, tile_n)
    # Multiple tiles: tile must be a multiple of 128 (lane-dense pred store).
    tile = _round_up(pl.cdiv(n, num_tiles), 128)
    return tile, num_tiles * tile


def openseg_adapter_forward(feat, w1_t, w2_t, b2, text_feature, *,
                            tile_n=512, compute_dtype=jnp.bfloat16):
    """OpenSeg_Adapter forward.

    feat:         (B, N, 768)
    w1_t:         (768, 192)  Linear1 weight pre-transposed to (in, out), no bias
    w2_t:         (192, 768)  Linear2 weight pre-transposed to (in, out)
    b2:           (768,)      Linear2 bias
    text_feature: (K, 768)    text embeddings (the module's self.text_feature)

    Returns (pred (B, K, N) f32, feat_out (B*N, 768) f32).
    """
    B, N, C = feat.shape
    assert C == C_IN
    K = text_feature.shape[0]

    # --- cheap layout prep outside the kernel ------------------------------
    tile_n_eff, n_pad = _pick_token_tile(N, tile_n)
    k_pad = _round_up(max(K, 1), 128)

    feat_c = feat.astype(compute_dtype)
    if n_pad != N:
        feat_c = jnp.pad(feat_c, ((0, 0), (0, n_pad - N), (0, 0)))
    w1_c = w1_t.astype(compute_dtype)
    w2_c = w2_t.astype(compute_dtype)
    b2_2d = b2.reshape(1, C).astype(jnp.float32)
    text_c = text_feature.astype(compute_dtype)
    if k_pad != K:
        text_c = jnp.pad(text_c, ((0, k_pad - K), (0, 0)))

    grid = (B, n_pad // tile_n_eff)

    feat_out3, pred_pad = pl.pallas_call(
        _adapter_kernel,
        out_shape=(
            jax.ShapeDtypeStruct((B, n_pad, C), jnp.float32),
            jax.ShapeDtypeStruct((B, k_pad, n_pad), jnp.float32),
        ),
        grid=grid,
        in_specs=[
            pl.BlockSpec((1, tile_n_eff, C), lambda b, j: (b, j, 0)),
            pl.BlockSpec((C, C_MID), lambda b, j: (0, 0)),
            pl.BlockSpec((C_MID, C), lambda b, j: (0, 0)),
            pl.BlockSpec((1, C), lambda b, j: (0, 0)),
            pl.BlockSpec((k_pad, C), lambda b, j: (0, 0)),
        ],
        out_specs=(
            pl.BlockSpec((1, tile_n_eff, C), lambda b, j: (b, j, 0)),
            pl.BlockSpec((1, k_pad, tile_n_eff), lambda b, j: (b, 0, j)),
        ),
        compiler_params=pltpu.CompilerParams(
            dimension_semantics=("parallel", "parallel"),
            vmem_limit_bytes=32 * 1024 * 1024,
        ),
    )(feat_c, w1_c, w2_c, b2_2d, text_c)

    feat_out = feat_out3[:, :N, :].reshape(B * N, C)   # free when n_pad == N
    pred = pred_pad[:, :K, :N]                         # drop K / N padding
    return pred, feat_out


if __name__ == "__main__":
    key = jax.random.PRNGKey(0)
    kf, kw1, kw2, kb2, kt = jax.random.split(key, 5)

    # Small shapes consistent with the module: C is fixed at 768 by __init__.
    B, N = 2, 8
    K = 20  # number of text classes

    feat = jax.random.normal(kf, (B, N, C_IN), dtype=jnp.float32)

    # Deterministic synthetic parameters (the module only fixes the shapes).
    # PyTorch Linear stores weight as (out, in); we keep the transposed (in, out).
    w1_t = jax.random.normal(kw1, (C_IN, C_MID), dtype=jnp.float32) * 0.02
    w2_t = jax.random.normal(kw2, (C_MID, C_IN), dtype=jnp.float32) * 0.02
    b2 = jax.random.normal(kb2, (C_IN,), dtype=jnp.float32) * 0.02
    # TODO(synk): the real module loads text_feature from an .npy checkpoint; synthetic stand-in here.
    text = jax.random.normal(kt, (K, C_IN), dtype=jnp.float32)

    pred, feat_out = openseg_adapter_forward(feat, w1_t, w2_t, b2, text)
    jax.block_until_ready((pred, feat_out))

    # Pure-JAX reference mirroring the kernel's bf16-input / f32-accumulate path.
    def bf(a):
        return a.astype(jnp.bfloat16).astype(jnp.float32)

    M = B * N
    xb = bf(feat.reshape(M, C_IN))
    h_ref = xb @ bf(w1_t)
    f2_ref = bf(h_ref) @ bf(w2_t) + b2
    ref_f = f2_ref * (1.0 - ALPHA) + xb * ALPHA
    ref_p = jnp.einsum('kc,bnc->bkn', bf(text), bf(ref_f).reshape(B, N, C_IN))

    assert feat_out.shape == (M, C_IN) and pred.shape == (B, K, N)
    assert jnp.allclose(feat_out, ref_f, atol=5e-3, rtol=5e-3)
    assert jnp.allclose(pred, ref_p, atol=2e-2, rtol=5e-3)

    print("KERNEL_OK")
</pallas_src>

<mosaic_0001>
module attributes {stable_mosaic.version = 11 : i64} {
  func.func @_adapter_kernel(%arg0: i32, %arg1: i32, %arg2: memref<1x8x768xbf16, #tpu.memory_space<vmem>>, %arg3: memref<768x192xbf16, #tpu.memory_space<vmem>>, %arg4: memref<192x768xbf16, #tpu.memory_space<vmem>>, %arg5: memref<1x768xf32, #tpu.memory_space<vmem>>, %arg6: memref<128x768xbf16, #tpu.memory_space<vmem>>, %arg7: memref<1x8x768xf32, #tpu.memory_space<vmem>>, %arg8: memref<1x128x8xf32, #tpu.memory_space<vmem>>) attributes {dimension_semantics = [#tpu.dimension_semantics<parallel>, #tpu.dimension_semantics<parallel>], iteration_bounds = array<i64: 2, 1>, scalar_prefetch = 0 : i64, scratch_operands = 0 : i64, tpu.core_type = #tpu.core_type<tc>, window_params = [{transform_indices = @transform_0, window_bounds = array<i64: 1, 8, 768>}, {pipeline_mode = #tpu.pipeline_mode<synchronous>, transform_indices = @transform_1, window_bounds = array<i64: 768, 192>}, {pipeline_mode = #tpu.pipeline_mode<synchronous>, transform_indices = @transform_2, window_bounds = array<i64: 192, 768>}, {pipeline_mode = #tpu.pipeline_mode<synchronous>, transform_indices = @transform_3, window_bounds = array<i64: 1, 768>}, {pipeline_mode = #tpu.pipeline_mode<synchronous>, transform_indices = @transform_4, window_bounds = array<i64: 128, 768>}, {transform_indices = @transform_5, window_bounds = array<i64: 1, 8, 768>}, {transform_indices = @transform_6, window_bounds = array<i64: 1, 128, 8>}]} {
    %c0 = arith.constant 0 : index
    %c0_0 = arith.constant 0 : index
    %c0_1 = arith.constant 0 : index
    %0 = vector.load %arg2[%c0, %c0_0, %c0_1] : memref<1x8x768xbf16, #tpu.memory_space<vmem>>, vector<1x8x768xbf16>
    %1 = vector.shape_cast %0 : vector<1x8x768xbf16> to vector<8x768xbf16>
    %c0_2 = arith.constant 0 : index
    %c0_3 = arith.constant 0 : index
    %2 = vector.load %arg3[%c0_2, %c0_3] : memref<768x192xbf16, #tpu.memory_space<vmem>>, vector<768x192xbf16>
    %cst = arith.constant dense<0.000000e+00> : vector<8x192xf32>
    %3 = tpu.matmul %1, %2, %cst {dimension_numbers = #tpu.dot_dimension_numbers<[1], [0], [0], [1], [0, 0, 1, 1], [], []>} : vector<8x768xbf16>, vector<768x192xbf16>, vector<8x192xf32> -> vector<8x192xf32>
    %4 = arith.truncf %3 : vector<8x192xf32> to vector<8x192xbf16>
    %c0_4 = arith.constant 0 : index
    %c0_5 = arith.constant 0 : index
    %5 = vector.load %arg4[%c0_4, %c0_5] : memref<192x768xbf16, #tpu.memory_space<vmem>>, vector<192x768xbf16>
    %cst_6 = arith.constant dense<0.000000e+00> : vector<8x768xf32>
    %6 = tpu.matmul %4, %5, %cst_6 {dimension_numbers = #tpu.dot_dimension_numbers<[1], [0], [0], [1], [0, 0, 1, 1], [], []>} : vector<8x192xbf16>, vector<192x768xbf16>, vector<8x768xf32> -> vector<8x768xf32>
    %c0_7 = arith.constant 0 : index
    %c0_8 = arith.constant 0 : index
    %7 = vector.load %arg5[%c0_7, %c0_8] : memref<1x768xf32, #tpu.memory_space<vmem>>, vector<1x768xf32>
    %8 = vector.broadcast %7 : vector<1x768xf32> to vector<8x768xf32>
    %9 = arith.addf %6, %8 : vector<8x768xf32>
    %cst_9 = arith.constant 0.949999988 : f32
    %10 = vector.broadcast %cst_9 : f32 to vector<8x768xf32>
    %11 = arith.mulf %9, %10 : vector<8x768xf32>
    %12 = arith.extf %1 : vector<8x768xbf16> to vector<8x768xf32>
    %cst_10 = arith.constant 5.000000e-02 : f32
    %13 = vector.broadcast %cst_10 : f32 to vector<8x768xf32>
    %14 = arith.mulf %12, %13 : vector<8x768xf32>
    %15 = arith.addf %11, %14 : vector<8x768xf32>
    %c0_11 = arith.constant 0 : index
    %c0_12 = arith.constant 0 : index
    %c0_13 = arith.constant 0 : index
    %16 = vector.load %arg7[%c0_11, %c0_12, %c0_13] : memref<1x8x768xf32, #tpu.memory_space<vmem>>, vector<1x8x768xf32>
    %17 = vector.shape_cast %16 : vector<1x8x768xf32> to vector<8x768xf32>
    %18 = vector.shape_cast %15 : vector<8x768xf32> to vector<1x8x768xf32>
    tpu.vector_store %arg7[%c0_11, %c0_12, %c0_13], %18 {strides = array<i32>} : memref<1x8x768xf32, #tpu.memory_space<vmem>>, vector<1x8x768xf32>,
    %c0_14 = arith.constant 0 : index
    %c0_15 = arith.constant 0 : index
    %19 = vector.load %arg6[%c0_14, %c0_15] : memref<128x768xbf16, #tpu.memory_space<vmem>>, vector<128x768xbf16>
    %20 = arith.truncf %15 : vector<8x768xf32> to vector<8x768xbf16>
    %cst_16 = arith.constant dense<0.000000e+00> : vector<128x8xf32>
    %21 = tpu.matmul %19, %20, %cst_16 {dimension_numbers = #tpu.dot_dimension_numbers<[1], [1], [0], [0], [0, 0, 1, 0], [], []>} : vector<128x768xbf16>, vector<8x768xbf16>, vector<128x8xf32> -> vector<128x8xf32>
    %c0_17 = arith.constant 0 : index
    %c0_18 = arith.constant 0 : index
    %c0_19 = arith.constant 0 : index
    %22 = vector.load %arg8[%c0_17, %c0_18, %c0_19] : memref<1x128x8xf32, #tpu.memory_space<vmem>>, vector<1x128x8xf32>
    %23 = vector.shape_cast %22 : vector<1x128x8xf32> to vector<128x8xf32>
    %24 = vector.shape_cast %21 : vector<128x8xf32> to vector<1x128x8xf32>
    tpu.vector_store %arg8[%c0_17, %c0_18, %c0_19], %24 {strides = array<i32>} : memref<1x128x8xf32, #tpu.memory_space<vmem>>, vector<1x128x8xf32>,
    return
  }
  func.func @transform_0(%arg0: i32, %arg1: i32) -> (i32, i32, i32) {
    %c0_i32 = arith.constant 0 : i32
    %c0_i32_0 = arith.constant 0 : i32
    return %arg0, %arg1, %c0_i32 : i32, i32, i32
  }
  func.func @transform_1(%arg0: i32, %arg1: i32) -> (i32, i32) {
    %c0_i32 = arith.constant 0 : i32
    %c0_i32_0 = arith.constant 0 : i32
    %c0_i32_1 = arith.constant 0 : i32
    return %c0_i32, %c0_i32_0 : i32, i32
  }
  func.func @transform_2(%arg0: i32, %arg1: i32) -> (i32, i32) {
    %c0_i32 = arith.constant 0 : i32
    %c0_i32_0 = arith.constant 0 : i32
    %c0_i32_1 = arith.constant 0 : i32
    return %c0_i32, %c0_i32_0 : i32, i32
  }
  func.func @transform_3(%arg0: i32, %arg1: i32) -> (i32, i32) {
    %c0_i32 = arith.constant 0 : i32
    %c0_i32_0 = arith.constant 0 : i32
    %c0_i32_1 = arith.constant 0 : i32
    return %c0_i32, %c0_i32_0 : i32, i32
  }
  func.func @transform_4(%arg0: i32, %arg1: i32) -> (i32, i32) {
    %c0_i32 = arith.constant 0 : i32
    %c0_i32_0 = arith.constant 0 : i32
    %c0_i32_1 = arith.constant 0 : i32
    return %c0_i32, %c0_i32_0 : i32, i32
  }
  func.func @transform_5(%arg0: i32, %arg1: i32) -> (i32, i32, i32) {
    %c0_i32 = arith.constant 0 : i32
    %c0_i32_0 = arith.constant 0 : i32
    return %arg0, %arg1, %c0_i32 : i32, i32, i32
  }
  func.func @transform_6(%arg0: i32, %arg1: i32) -> (i32, i32, i32) {
    %c0_i32 = arith.constant 0 : i32
    %c0_i32_0 = arith.constant 0 : i32
    return %arg0, %c0_i32, %arg1 : i32, i32, i32
  }
}

</mosaic_0001>

<llo_original>
// kernel: tpu_custom_call.1
$region0: #{tpu_custom_call.1}
  #allocation0 [shape = 'u32[]', space=smem, size = 0x4, offset = 0x4, fixed_abs, tag = 'smem constant byte address 0x4 - core index']
  #allocation1 [shape = 'u32[72,128]{1,0:T(1,128)}', space=vmem, size = 0x9000, scoped, tag = 'internal scratch']
  %s0 = inlined_call_operand.vmem [shape: bf16[2,8,768], index: 0, kind: input, shape index: {}]
  %s1 = inlined_call_operand.vmem [shape: bf16[768,192], index: 1, kind: input, shape index: {}]
  %s2 = inlined_call_operand.vmem [shape: bf16[192,768], index: 2, kind: input, shape index: {}]
  %s3 = inlined_call_operand.vmem [shape: f32[1,768], index: 3, kind: input, shape index: {}]
  %s4 = inlined_call_operand.vmem [shape: bf16[128,768], index: 4, kind: input, shape index: {}]
  %s5 = inlined_call_operand.hbm [shape: f32[2,8,768], index: 5, kind: output, shape index: {0}]
  %s6 = inlined_call_operand.vmem [shape: f32[2,128,8], index: 6, kind: output, shape index: {1}]
  %7 = xla_tuple %s5, %s6
  %s8 = sld [smem:[#allocation0]]
  $region61: #{tpu_custom_call.1} parent=0
    _
  %s10 = ssub.s32 1, %s8
  %s11 = scalar_select 0, %s10, %s8
  $region1: #{tpu_custom_call.1} parent=0
    #allocation2 [shape = 'u8[49152]{0}', space=vmem, size = 0xc000, scoped, tag = 'output window, operand 0']
    #allocation3 [shape = 's32[2]{0}', space=sflag, size = 0x8, scoped, tag = 'scoped memory for tpu_custom_call.1']
    %12 = vsyncpa [#allocation3], 0
    %s13 = scalar_lea.sflag [#allocation3], 1
    %14 = vsyncpa %s13, 0
    loop: start=0, step=1, limit=4
    $region2: #{tpu_custom_call.1} parent=1 // loop_pre_header
      _
    $region3: #{tpu_custom_call.1} parent=1 // loop_header
      %s16 = sphi 0, %s20
      %p17 = scmp.ge.s32.totalorder %s16, 4
      %s23 = sphi 0, %s35
      %s24 = sphi 0, %s31
      %s25 = sphi 0, %s23
      %s26 = sphi 0, %s24
      %s27 = sphi 0, %s25
      %s28 = sphi 0, %s26
      %s40 = sphi 0, %s42
      %s43 = sphi 0, %s40
      %s44 = sphi 0, %s43
      %s60 = sphi 0, %s44
      %s64 = sphi 0, %s64
      %s66 = sphi 0, %s64
      %s67 = sphi 0, %s66
      %s81 = sphi 0, %s67
      %s85 = sphi 0, %s85
      %s87 = sphi 0, %s85
      %s88 = sphi 0, %s87
      %s102 = sphi 0, %s88
      %s106 = sphi 0, %s106
      %s108 = sphi 0, %s106
      %s109 = sphi 0, %s108
      %s123 = sphi 0, %s109
      %s127 = sphi 0, %s127
      %s129 = sphi 0, %s127
      %s130 = sphi 0, %s129
      %s144 = sphi 0, %s130
      %s152 = sphi 0, %s154
      %s155 = sphi 0, %s152
      %s156 = sphi 0, %s155
      %s172 = sphi 0, %s156
      %s180 = sphi 0, %s182
      %s183 = sphi 0, %s180
      %s184 = sphi 0, %s183
      %s200 = sphi 0, %s184
    $region4: #{tpu_custom_call.1} parent=1 // loop_header_branch
      %19 = sbr.rel (%p17) target = $region8
    $region5: #{tpu_custom_call.1} parent=1 // loop_body
      %s21 = ssub.s32 %s16, 1
      %s22 = ssub.s32 %s16, 2
      %s29 = sadd.s32 1, %s24
      %p30 = scmp.ge.s32.totalorder %s29, 1
      %s31 = scalar_select %p30, 0, %s29
      %s32 = sadd.s32 1, %s23
      %s33 = scalar_select %p30, %s32, %s23
      %p34 = scmp.ge.s32.totalorder %s33, 2
      %s35 = scalar_select %p34, 0, %s33
      %s36 = ssub.s32 %s23, %s35
      %s37 = ssub.s32 %s24, %s31
      %s38 = sor.u32 %s36, %s37
      %p39 = scmp.eq.s32.totalorder %s38, 0
      %s41 = sadd.s32 %s40, 1
      %s42 = scalar_select %p39, %s40, %s41
      %p45 = pneg %p39
      %p46 = scmp.eq.s32.totalorder %s16, 1
      %p47 = por %p45, %p46
      %p48 = scmp.ne.s32.totalorder %s40, %s43
      %p49 = scmp.eq.s32.totalorder %s16, 0
      %p50 = por %p48, %p49
      %p51 = scmp.ne.s32.totalorder %s40, %s43
      %p52 = scmp.eq.s32.totalorder %s21, 1
      %p53 = por %p51, %p52
      %p54 = scmp.ne.s32.totalorder %s43, %s44
      %p55 = scmp.eq.s32.totalorder %s21, 0
      %p56 = por %p54, %p55
      %p57 = scmp.ne.s32.totalorder %s43, %s44
      %p58 = scmp.eq.s32.totalorder %s22, 1
      %p59 = por %p57, %p58
      %p61 = scmp.ne.s32.totalorder %s44, %s60
      %p62 = scmp.eq.s32.totalorder %s22, 0
      %p63 = por %p61, %p62
      %s65 = sadd.s32 %s64, 1
      %p68 = scmp.eq.s32.totalorder %s16, 1
      %p69 = scmp.ne.s32.totalorder %s64, %s66
      %p70 = scmp.eq.s32.totalorder %s16, 0
      %p71 = por %p69, %p70
      %p72 = scmp.ne.s32.totalorder %s64, %s66
      %p73 = scmp.eq.s32.totalorder %s21, 1
      %p74 = por %p72, %p73
      %p75 = scmp.ne.s32.totalorder %s66, %s67
      %p76 = scmp.eq.s32.totalorder %s21, 0
      %p77 = por %p75, %p76
      %p78 = scmp.ne.s32.totalorder %s66, %s67
      %p79 = scmp.eq.s32.totalorder %s22, 1
      %p80 = por %p78, %p79
      %p82 = scmp.ne.s32.totalorder %s67, %s81
      %p83 = scmp.eq.s32.totalorder %s22, 0
      %p84 = por %p82, %p83
      %s86 = sadd.s32 %s85, 1
      %p89 = scmp.eq.s32.totalorder %s16, 1
      %p90 = scmp.ne.s32.totalorder %s85, %s87
      %p91 = scmp.eq.s32.totalorder %s16, 0
      %p92 = por %p90, %p91
      %p93 = scmp.ne.s32.totalorder %s85, %s87
      %p94 = scmp.eq.s32.totalorder %s21, 1
      %p95 = por %p93, %p94
      %p96 = scmp.ne.s32.totalorder %s87, %s88
      %p97 = scmp.eq.s32.totalorder %s21, 0
      %p98 = por %p96, %p97
      %p99 = scmp.ne.s32.totalorder %s87, %s88
      %p100 = scmp.eq.s32.totalorder %s22, 1
      %p101 = por %p99, %p100
      %p103 = scmp.ne.s32.totalorder %s88, %s102
      %p104 = scmp.eq.s32.totalorder %s22, 0
      %p105 = por %p103, %p104
      %s107 = sadd.s32 %s106, 1
      %p110 = scmp.eq.s32.totalorder %s16, 1
      %p111 = scmp.ne.s32.totalorder %s106, %s108
      %p112 = scmp.eq.s32.totalorder %s16, 0
      %p113 = por %p111, %p112
      %p114 = scmp.ne.s32.totalorder %s106, %s108
      %p115 = scmp.eq.s32.totalorder %s21, 1
      %p116 = por %p114, %p115
      %p117 = scmp.ne.s32.totalorder %s108, %s109
      %p118 = scmp.eq.s32.totalorder %s21, 0
      %p119 = por %p117, %p118
      %p120 = scmp.ne.s32.totalorder %s108, %s109
      %p121 = scmp.eq.s32.totalorder %s22, 1
      %p122 = por %p120, %p121
      %p124 = scmp.ne.s32.totalorder %s109, %s123
      %p125 = scmp.eq.s32.totalorder %s22, 0
      %p126 = por %p124, %p125
      %s128 = sadd.s32 %s127, 1
      %p131 = scmp.eq.s32.totalorder %s16, 1
      %p132 = scmp.ne.s32.totalorder %s127, %s129
      %p133 = scmp.eq.s32.totalorder %s16, 0
      %p134 = por %p132, %p133
      %p135 = scmp.ne.s32.totalorder %s127, %s129
      %p136 = scmp.eq.s32.totalorder %s21, 1
      %p137 = por %p135, %p136
      %p138 = scmp.ne.s32.totalorder %s129, %s130
      %p139 = scmp.eq.s32.totalorder %s21, 0
      %p140 = por %p138, %p139
      %p141 = scmp.ne.s32.totalorder %s129, %s130
      %p142 = scmp.eq.s32.totalorder %s22, 1
      %p143 = por %p141, %p142
      %p145 = scmp.ne.s32.totalorder %s130, %s144
      %p146 = scmp.eq.s32.totalorder %s22, 0
      %p147 = por %p145, %p146
      %s148 = ssub.s32 %s23, %s35
      %s149 = ssub.s32 %s24, %s31
      %s150 = sor.u32 %s148, %s149
      %p151 = scmp.eq.s32.totalorder %s150, 0
      %s153 = sadd.s32 %s152, 1
      %s154 = scalar_select %p151, %s152, %s153
      %p157 = pneg %p151
      %p158 = scmp.eq.s32.totalorder %s16, 1
      %p159 = por %p157, %p158
      %p160 = scmp.ne.s32.totalorder %s152, %s155
      %p161 = scmp.eq.s32.totalorder %s16, 0
      %p162 = por %p160, %p161
      %p163 = scmp.ne.s32.totalorder %s152, %s155
      %p164 = scmp.eq.s32.totalorder %s21, 1
      %p165 = por %p163, %p164
      %p166 = scmp.ne.s32.totalorder %s155, %s156
      %p167 = scmp.eq.s32.totalorder %s21, 0
      %p168 = por %p166, %p167
      %p169 = scmp.ne.s32.totalorder %s155, %s156
      %p170 = scmp.eq.s32.totalorder %s22, 1
      %p171 = por %p169, %p170
      %p173 = scmp.ne.s32.totalorder %s156, %s172
      %p174 = scmp.eq.s32.totalorder %s22, 0
      %p175 = por %p173, %p174
      %s176 = ssub.s32 %s23, %s35
      %s177 = ssub.s32 %s24, %s31
      %s178 = sor.u32 %s176, %s177
      %p179 = scmp.eq.s32.totalorder %s178, 0
      %s181 = sadd.s32 %s180, 1
      %s182 = scalar_select %p179, %s180, %s181
      %p185 = pneg %p179
      %p186 = scmp.eq.s32.totalorder %s16, 1
      %p187 = por %p185, %p186
      %p188 = scmp.ne.s32.totalorder %s180, %s183
      %p189 = scmp.eq.s32.totalorder %s16, 0
      %p190 = por %p188, %p189
      %p191 = scmp.ne.s32.totalorder %s180, %s183
      %p192 = scmp.eq.s32.totalorder %s21, 1
      %p193 = por %p191, %p192
      %p194 = scmp.ne.s32.totalorder %s183, %s184
      %p195 = scmp.eq.s32.totalorder %s21, 0
      %p196 = por %p194, %p195
      %p197 = scmp.ne.s32.totalorder %s183, %s184
      %p198 = scmp.eq.s32.totalorder %s22, 1
      %p199 = por %p197, %p198
      %p201 = scmp.ne.s32.totalorder %s184, %s200
      %p202 = scmp.eq.s32.totalorder %s22, 0
      %p203 = por %p201, %p202
      %p204 = scmp.le.s32.totalorder 1, %s16
      %p205 = scmp.lt.s32.totalorder %s16, 3
      %p206 = pnand %p204, %p205
      %p207 = pneg %p206
      // Predicated region
      $region9: #{tpu_custom_call.1} parent=5 // pred_check
        _
      $region10: #{tpu_custom_call.1} parent=5 // pred_check_branch
        %209 = sbr.rel (%p206) target = $region12
      $region11: #{tpu_custom_call.1} parent=5 // pred_region
        %s210 = ssub.s32 %s16, 1
        // Predicated region
        $region13: #{tpu_custom_call.1} parent=11 // pred_check
          %p211 = pneg %p77
        $region14: #{tpu_custom_call.1} parent=11 // pred_check_branch
          %213 = sbr.rel (%p211) target = $region16
        $region15: #{tpu_custom_call.1} parent=11 // pred_region
          _
        $region16: #{tpu_custom_call.1} parent=11 // pred_fallthru
          _
        // Predicated region
        $region17: #{tpu_custom_call.1} parent=11 // pred_check
          %p214 = pneg %p98
        $region18: #{tpu_custom_call.1} parent=11 // pred_check_branch
          %216 = sbr.rel (%p214) target = $region20
        $region19: #{tpu_custom_call.1} parent=11 // pred_region
          _
        $region20: #{tpu_custom_call.1} parent=11 // pred_fallthru
          _
        // Predicated region
        $region21: #{tpu_custom_call.1} parent=11 // pred_check
          %p217 = pneg %p119
        $region22: #{tpu_custom_call.1} parent=11 // pred_check_branch
          %219 = sbr.rel (%p217) target = $region24
        $region23: #{tpu_custom_call.1} parent=11 // pred_region
          _
        $region24: #{tpu_custom_call.1} parent=11 // pred_fallthru
          _
        // Predicated region
        $region25: #{tpu_custom_call.1} parent=11 // pred_check
          %p220 = pneg %p140
        $region26: #{tpu_custom_call.1} parent=11 // pred_check_branch
          %222 = sbr.rel (%p220) target = $region28
        $region27: #{tpu_custom_call.1} parent=11 // pred_region
          _
        $region28: #{tpu_custom_call.1} parent=11 // pred_fallthru
          _
      $region12: #{tpu_custom_call.1} parent=5 // pred_fallthru
        _
      %p223 = scmp.lt.s32.totalorder %s16, 2
      // Predicated region
      $region29: #{tpu_custom_call.1} parent=5 // pred_check
        %p224 = pneg %p223
      $region30: #{tpu_custom_call.1} parent=5 // pred_check_branch
        %226 = sbr.rel (%p224) target = $region32
      $region31: #{tpu_custom_call.1} parent=5 // pred_region
        // Predicated region
        $region33: #{tpu_custom_call.1} parent=31 // pred_check
          %p227 = pneg %p50
        $region34: #{tpu_custom_call.1} parent=31 // pred_check_branch
          %229 = sbr.rel (%p227) target = $region36
        $region35: #{tpu_custom_call.1} parent=31 // pred_region
          %p230 = scmp.lt.s32.totalorder %s23, 1
          %s231 = scalar_select %p230, %s23, 1
          %p232 = scmp.lt.s32.totalorder %s24, 0
          %s233 = scalar_select %p232, %s24, 0
          %s234 = smul.addr %s233, 6
          %s235 = smul.addr %s231, 6
          %s236 = sadd.s32 %s234, %s235
          %s237 = smul.addr %s236, 4
          %s238 = scalar_lea.vmem %s0, %s237
        $region36: #{tpu_custom_call.1} parent=31 // pred_fallthru
          _
      $region32: #{tpu_custom_call.1} parent=5 // pred_fallthru
        _
      %p239 = scmp.le.s32.totalorder 1, %s16
      %p240 = scmp.lt.s32.totalorder %s16, 3
      %p241 = pnand %p239, %p240
      %p242 = pneg %p241
      // Predicated region
      $region37: #{tpu_custom_call.1} parent=5 // pred_check
        _
      $region38: #{tpu_custom_call.1} parent=5 // pred_check_branch
        %244 = sbr.rel (%p241) target = $region40
      $region39: #{tpu_custom_call.1} parent=5 // pred_region
        %s245 = ssub.s32 %s16, 1
        %p246 = scmp.lt.s32.totalorder %s25, 1
        %s247 = scalar_select %p246, %s25, 1
        %p248 = scmp.lt.s32.totalorder %s26, 0
        %s249 = scalar_select %p248, %s26, 0
        %s250 = smul.addr %s249, 6
        %s251 = smul.addr %s247, 6
        %s252 = sadd.s32 %s250, %s251
        %s253 = smul.addr %s252, 4
        %s254 = scalar_lea.vmem %s0, %s253
        %p255 = pneg %p56
        %p256 = pneg %p53
        %p257 = pneg %p77
        %p258 = pneg %p74
        %p259 = pneg %p98
        %p260 = pneg %p95
        %p261 = pneg %p119
        %p262 = pneg %p116
        %p263 = pneg %p140
        %p264 = pneg %p137
        %p265 = pneg %p168
        %p266 = pneg %p165
        %s267 = sand.u32 %s155, 1
        %s268 = scalar_lea.sflag [#allocation3], %s267
        %s269 = sand.u32 %s155, 1
        %s270 = smul.addr %s269, 48
        %s271 = scalar_lea.vmem [#allocation2], %s270
        %p272 = pneg %p196
        %p273 = pneg %p193
        %p274 = scmp.lt.s32.totalorder %s25, 1
        %s275 = scalar_select %p274, %s25, 1
        %p276 = scmp.lt.s32.totalorder %s26, 0
        %s277 = scalar_select %p276, %s26, 0
        %s278 = smul.addr %s275, 16
        %s279 = sadd.s32 %s277, %s278
        %s280 = smul.addr %s279, 8
        %s281 = scalar_lea.vmem %s6, %s280
        %p282 = scmp.lt.s32.totalorder %s25, 1
        %s283 = scalar_select %p282, %s25, 1
        %p284 = scmp.lt.s32.totalorder %s26, 0
        %s285 = scalar_select %p284, %s26, 0
        %s286 = smul.addr %s285, 6
        %s287 = smul.addr %s283, 6
        %s288 = sadd.s32 %s286, %s287
        %s289 = smul.addr %s288, 4
        %s290 = scalar_lea.vmem %s0, %s289
        %p291 = scmp.lt.s32.totalorder %s25, 1
        %s292 = scalar_select %p291, %s25, 1
        %p293 = scmp.lt.s32.totalorder %s26, 0
        %s294 = scalar_select %p293, %s26, 0
        %s295 = smul.addr %s292, 16
        %s296 = sadd.s32 %s294, %s295
        %s297 = smul.addr %s296, 8
        %s298 = scalar_lea.vmem %s6, %s297
        %v300 = vld [vmem:[%s290] sm:$0xff]
        %v301 = vld [vmem:[%s290 + $0x8] sm:$0xff]
        %v302 = vld [vmem:[%s290 + $0x10] sm:$0xff]
        %v303 = vld [vmem:[%s1] sm:$0xff]
        %v304 = vld [vmem:[%s1 + $0x8] sm:$0xff]
        %v305 = vld [vmem:[%s1 + $0x10] sm:$0xff]
        %v306 = vld [vmem:[%s1 + $0x18] sm:$0xff]
        %v307 = vld [vmem:[%s1 + $0x20] sm:$0xff]
        %v308 = vld [vmem:[%s1 + $0x28] sm:$0xff]
        %v309 = vld [vmem:[%s1 + $0x30] sm:$0xff]
        %v310 = vld [vmem:[%s1 + $0x38] sm:$0xff]
        %v311 = vld [vmem:[%s1 + $0x40] sm:$0xff]
        %v312 = vld [vmem:[%s1 + $0x48] sm:$0xff]
        %v313 = vld [vmem:[%s1 + $0x50] sm:$0xff]
        %v314 = vld [vmem:[%s1 + $0x58] sm:$0xff]
        %v315 = vld [vmem:[%s1 + $0x60] sm:$0xff]
        %v316 = vld [vmem:[%s1 + $0x68] sm:$0xff]
        %v317 = vld [vmem:[%s1 + $0x70] sm:$0xff]
        %v318 = vld [vmem:[%s1 + $0x78] sm:$0xff]
        %v319 = vld [vmem:[%s1 + $0x80] sm:$0xff]
        %v320 = vld [vmem:[%s1 + $0x88] sm:$0xff]
        %v321 = vld [vmem:[%s1 + $0x90] sm:$0xff]
        %v322 = vld [vmem:[%s1 + $0x98] sm:$0xff]
        %v323 = vld [vmem:[%s1 + $0xa0] sm:$0xff]
        %v324 = vld [vmem:[%s1 + $0xa8] sm:$0xff]
        %v325 = vld [vmem:[%s1 + $0xb0] sm:$0xff]
        %v326 = vld [vmem:[%s1 + $0xb8] sm:$0xff]
        %v327 = vld [vmem:[%s1 + $0xc0] sm:$0xff]
        %v328 = vld [vmem:[%s1 + $0xc8] sm:$0xff]
        %v329 = vld [vmem:[%s1 + $0xd0] sm:$0xff]
        %v330 = vld [vmem:[%s1 + $0xd8] sm:$0xff]
        %v331 = vld [vmem:[%s1 + $0xe0] sm:$0xff]
        %v332 = vld [vmem:[%s1 + $0xe8] sm:$0xff]
        %v333 = vld [vmem:[%s1 + $0xf0] sm:$0xff]
        %v334 = vld [vmem:[%s1 + $0xf8] sm:$0xff]
        %v335 = vld [vmem:[%s1 + $0x100] sm:$0xff]
        %v336 = vld [vmem:[%s1 + $0x108] sm:$0xff]
        %v337 = vld [vmem:[%s1 + $0x110] sm:$0xff]
        %v338 = vld [vmem:[%s1 + $0x118] sm:$0xff]
        %v339 = vld [vmem:[%s1 + $0x120] sm:$0xff]
        %v340 = vld [vmem:[%s1 + $0x128] sm:$0xff]
        %v341 = vld [vmem:[%s1 + $0x130] sm:$0xff]
        %v342 = vld [vmem:[%s1 + $0x138] sm:$0xff]
        %v343 = vld [vmem:[%s1 + $0x140] sm:$0xff]
        %v344 = vld [vmem:[%s1 + $0x148] sm:$0xff]
        %v345 = vld [vmem:[%s1 + $0x150] sm:$0xff]
        %v346 = vld [vmem:[%s1 + $0x158] sm:$0xff]
        %v347 = vld [vmem:[%s1 + $0x160] sm:$0xff]
        %v348 = vld [vmem:[%s1 + $0x168] sm:$0xff]
        %v349 = vld [vmem:[%s1 + $0x170] sm:$0xff]
        %v350 = vld [vmem:[%s1 + $0x178] sm:$0xff]
        %v351 = vld [vmem:[%s1 + $0x180] sm:$0xff]
        %v352 = vld [vmem:[%s1 + $0x188] sm:$0xff]
        %v353 = vld [vmem:[%s1 + $0x190] sm:$0xff]
        %v354 = vld [vmem:[%s1 + $0x198] sm:$0xff]
        %v355 = vld [vmem:[%s1 + $0x1a0] sm:$0xff]
        %v356 = vld [vmem:[%s1 + $0x1a8] sm:$0xff]
        %v357 = vld [vmem:[%s1 + $0x1b0] sm:$0xff]
        %v358 = vld [vmem:[%s1 + $0x1b8] sm:$0xff]
        %v359 = vld [vmem:[%s1 + $0x1c0] sm:$0xff]
        %v360 = vld [vmem:[%s1 + $0x1c8] sm:$0xff]
        %v361 = vld [vmem:[%s1 + $0x1d0] sm:$0xff]
        %v362 = vld [vmem:[%s1 + $0x1d8] sm:$0xff]
        %v363 = vld [vmem:[%s1 + $0x1e0] sm:$0xff]
        %v364 = vld [vmem:[%s1 + $0x1e8] sm:$0xff]
        %v365 = vld [vmem:[%s1 + $0x1f0] sm:$0xff]
        %v366 = vld [vmem:[%s1 + $0x1f8] sm:$0xff]
        %v367 = vld [vmem:[%s1 + $0x200] sm:$0xff]
        %v368 = vld [vmem:[%s1 + $0x208] sm:$0xff]
        %v369 = vld [vmem:[%s1 + $0x210] sm:$0xff]
        %v370 = vld [vmem:[%s1 + $0x218] sm:$0xff]
        %v371 = vld [vmem:[%s1 + $0x220] sm:$0xff]
        %v372 = vld [vmem:[%s1 + $0x228] sm:$0xff]
        %v373 = vld [vmem:[%s1 + $0x230] sm:$0xff]
        %v374 = vld [vmem:[%s1 + $0x238] sm:$0xff]
        %v375 = vld [vmem:[%s1 + $0x240] sm:$0xff]
        %v376 = vld [vmem:[%s1 + $0x248] sm:$0xff]
        %v377 = vld [vmem:[%s1 + $0x250] sm:$0xff]
        %v378 = vld [vmem:[%s1 + $0x258] sm:$0xff]
        %v379 = vld [vmem:[%s1 + $0x260] sm:$0xff]
        %v380 = vld [vmem:[%s1 + $0x268] sm:$0xff]
        %v381 = vld [vmem:[%s1 + $0x270] sm:$0xff]
        %v382 = vld [vmem:[%s1 + $0x278] sm:$0xff]
        %v383 = vld [vmem:[%s1 + $0x280] sm:$0xff]
        %v384 = vld [vmem:[%s1 + $0x288] sm:$0xff]
        %v385 = vld [vmem:[%s1 + $0x290] sm:$0xff]
        %v386 = vld [vmem:[%s1 + $0x298] sm:$0xff]
        %v387 = vld [vmem:[%s1 + $0x2a0] sm:$0xff]
        %v388 = vld [vmem:[%s1 + $0x2a8] sm:$0xff]
        %v389 = vld [vmem:[%s1 + $0x2b0] sm:$0xff]
        %v390 = vld [vmem:[%s1 + $0x2b8] sm:$0xff]
        %v391 = vld [vmem:[%s1 + $0x2c0] sm:$0xff]
        %v392 = vld [vmem:[%s1 + $0x2c8] sm:$0xff]
        %v393 = vld [vmem:[%s1 + $0x2d0] sm:$0xff]
        %v394 = vld [vmem:[%s1 + $0x2d8] sm:$0xff]
        %v395 = vld [vmem:[%s1 + $0x2e0] sm:$0xff]
        %v396 = vld [vmem:[%s1 + $0x2e8] sm:$0xff]
        %v397 = vld [vmem:[%s1 + $0x2f0] sm:$0xff]
        %v398 = vld [vmem:[%s1 + $0x2f8] sm:$0xff]
        %v402 = vunpack.c.l.b16 %v300
        %v403 = vunpack.c.h.b16 %v300
        %v404 = vunpack.c.l.b16 %v301
        %v405 = vunpack.c.h.b16 %v301
        %v406 = vunpack.c.l.b16 %v302
        %v407 = vunpack.c.h.b16 %v302
        %v408 = vpack.c.b16 %v402, %v402
        %v409 = vpack.c.b16 %v403, %v403
        %v410 = vpack.c.b16 %v404, %v404
        %v411 = vpack.c.b16 %v405, %v405
        %v412 = vpack.c.b16 %v406, %v406
        %v413 = vpack.c.b16 %v407, %v407
        %v516 = vunpack.c.l.b16 %v303
        %v517 = vunpack.c.h.b16 %v303
        %v518 = vunpack.c.l.b16 %v304
        %v519 = vunpack.c.h.b16 %v304
        %v520 = vunpack.c.l.b16 %v305
        %v521 = vunpack.c.h.b16 %v305
        %v522 = vunpack.c.l.b16 %v306
        %v523 = vunpack.c.h.b16 %v306
        %v524 = vunpack.c.l.b16 %v307
        %v525 = vunpack.c.h.b16 %v307
        %v526 = vunpack.c.l.b16 %v308
        %v527 = vunpack.c.h.b16 %v308
        %v528 = vunpack.c.l.b16 %v309
        %v529 = vunpack.c.h.b16 %v309
        %v530 = vunpack.c.l.b16 %v310
        %v531 = vunpack.c.h.b16 %v310
        %v532 = vunpack.c.l.b16 %v311
        %v533 = vunpack.c.h.b16 %v311
        %v534 = vunpack.c.l.b16 %v312
        %v535 = vunpack.c.h.b16 %v312
        %v536 = vunpack.c.l.b16 %v313
        %v537 = vunpack.c.h.b16 %v313
        %v538 = vunpack.c.l.b16 %v314
        %v539 = vunpack.c.h.b16 %v314
        %v540 = vunpack.c.l.b16 %v315
        %v541 = vunpack.c.h.b16 %v315
        %v542 = vunpack.c.l.b16 %v316
        %v543 = vunpack.c.h.b16 %v316
        %v544 = vunpack.c.l.b16 %v317
        %v545 = vunpack.c.h.b16 %v317
        %v546 = vunpack.c.l.b16 %v318
        %v547 = vunpack.c.h.b16 %v318
        %v548 = vunpack.c.l.b16 %v319
        %v549 = vunpack.c.h.b16 %v319
        %v550 = vunpack.c.l.b16 %v320
        %v551 = vunpack.c.h.b16 %v320
        %v552 = vunpack.c.l.b16 %v321
        %v553 = vunpack.c.h.b16 %v321
        %v554 = vunpack.c.l.b16 %v322
        %v555 = vunpack.c.h.b16 %v322
        %v556 = vunpack.c.l.b16 %v323
        %v557 = vunpack.c.h.b16 %v323
        %v558 = vunpack.c.l.b16 %v324
        %v559 = vunpack.c.h.b16 %v324
        %v560 = vunpack.c.l.b16 %v325
        %v561 = vunpack.c.h.b16 %v325
        %v562 = vunpack.c.l.b16 %v326
        %v563 = vunpack.c.h.b16 %v326
        %v564 = vunpack.c.l.b16 %v327
        %v565 = vunpack.c.h.b16 %v327
        %v566 = vunpack.c.l.b16 %v328
        %v567 = vunpack.c.h.b16 %v328
        %v568 = vunpack.c.l.b16 %v329
        %v569 = vunpack.c.h.b16 %v329
        %v570 = vunpack.c.l.b16 %v330
        %v571 = vunpack.c.h.b16 %v330
        %v572 = vunpack.c.l.b16 %v331
        %v573 = vunpack.c.h.b16 %v331
        %v574 = vunpack.c.l.b16 %v332
        %v575 = vunpack.c.h.b16 %v332
        %v576 = vunpack.c.l.b16 %v333
        %v577 = vunpack.c.h.b16 %v333
        %v578 = vunpack.c.l.b16 %v334
        %v579 = vunpack.c.h.b16 %v334
        %v580 = vunpack.c.l.b16 %v335
        %v581 = vunpack.c.h.b16 %v335
        %v582 = vunpack.c.l.b16 %v336
        %v583 = vunpack.c.h.b16 %v336
        %v584 = vunpack.c.l.b16 %v337
        %v585 = vunpack.c.h.b16 %v337
        %v586 = vunpack.c.l.b16 %v338
        %v587 = vunpack.c.h.b16 %v338
        %v588 = vunpack.c.l.b16 %v339
        %v589 = vunpack.c.h.b16 %v339
        %v590 = vunpack.c.l.b16 %v340
        %v591 = vunpack.c.h.b16 %v340
        %v592 = vunpack.c.l.b16 %v341
        %v593 = vunpack.c.h.b16 %v341
        %v594 = vunpack.c.l.b16 %v342
        %v595 = vunpack.c.h.b16 %v342
        %v596 = vunpack.c.l.b16 %v343
        %v597 = vunpack.c.h.b16 %v343
        %v598 = vunpack.c.l.b16 %v344
        %v599 = vunpack.c.h.b16 %v344
        %v600 = vunpack.c.l.b16 %v345
        %v601 = vunpack.c.h.b16 %v345
        %v602 = vunpack.c.l.b16 %v346
        %v603 = vunpack.c.h.b16 %v346
        %v604 = vunpack.c.l.b16 %v347
        %v605 = vunpack.c.h.b16 %v347
        %v606 = vunpack.c.l.b16 %v348
        %v607 = vunpack.c.h.b16 %v348
        %v608 = vunpack.c.l.b16 %v349
        %v609 = vunpack.c.h.b16 %v349
        %v610 = vunpack.c.l.b16 %v350
        %v611 = vunpack.c.h.b16 %v350
        %v612 = vunpack.c.l.b16 %v351
        %v613 = vunpack.c.h.b16 %v351
        %v614 = vunpack.c.l.b16 %v352
        %v615 = vunpack.c.h.b16 %v352
        %v616 = vunpack.c.l.b16 %v353
        %v617 = vunpack.c.h.b16 %v353
        %v618 = vunpack.c.l.b16 %v354
        %v619 = vunpack.c.h.b16 %v354
        %v620 = vunpack.c.l.b16 %v355
        %v621 = vunpack.c.h.b16 %v355
        %v622 = vunpack.c.l.b16 %v356
        %v623 = vunpack.c.h.b16 %v356
        %v624 = vunpack.c.l.b16 %v357
        %v625 = vunpack.c.h.b16 %v357
        %v626 = vunpack.c.l.b16 %v358
        %v627 = vunpack.c.h.b16 %v358
        %v628 = vunpack.c.l.b16 %v359
        %v629 = vunpack.c.h.b16 %v359
        %v630 = vunpack.c.l.b16 %v360
        %v631 = vunpack.c.h.b16 %v360
        %v632 = vunpack.c.l.b16 %v361
        %v633 = vunpack.c.h.b16 %v361
        %v634 = vunpack.c.l.b16 %v362
        %v635 = vunpack.c.h.b16 %v362
        %v636 = vunpack.c.l.b16 %v363
        %v637 = vunpack.c.h.b16 %v363
        %v638 = vunpack.c.l.b16 %v364
        %v639 = vunpack.c.h.b16 %v364
        %v640 = vunpack.c.l.b16 %v365
        %v641 = vunpack.c.h.b16 %v365
        %v642 = vunpack.c.l.b16 %v366
        %v643 = vunpack.c.h.b16 %v366
        %v644 = vunpack.c.l.b16 %v367
        %v645 = vunpack.c.h.b16 %v367
        %v646 = vunpack.c.l.b16 %v368
        %v647 = vunpack.c.h.b16 %v368
        %v648 = vunpack.c.l.b16 %v369
        %v649 = vunpack.c.h.b16 %v369
        %v650 = vunpack.c.l.b16 %v370
        %v651 = vunpack.c.h.b16 %v370
        %v652 = vunpack.c.l.b16 %v371
        %v653 = vunpack.c.h.b16 %v371
        %v654 = vunpack.c.l.b16 %v372
        %v655 = vunpack.c.h.b16 %v372
        %v656 = vunpack.c.l.b16 %v373
        %v657 = vunpack.c.h.b16 %v373
        %v658 = vunpack.c.l.b16 %v374
        %v659 = vunpack.c.h.b16 %v374
        %v660 = vunpack.c.l.b16 %v375
        %v661 = vunpack.c.h.b16 %v375
        %v662 = vunpack.c.l.b16 %v376
        %v663 = vunpack.c.h.b16 %v376
        %v664 = vunpack.c.l.b16 %v377
        %v665 = vunpack.c.h.b16 %v377
        %v666 = vunpack.c.l.b16 %v378
        %v667 = vunpack.c.h.b16 %v378
        %v668 = vunpack.c.l.b16 %v379
        %v669 = vunpack.c.h.b16 %v379
        %v670 = vunpack.c.l.b16 %v380
        %v671 = vunpack.c.h.b16 %v380
        %v672 = vunpack.c.l.b16 %v381
        %v673 = vunpack.c.h.b16 %v381
        %v674 = vunpack.c.l.b16 %v382
        %v675 = vunpack.c.h.b16 %v382
        %v676 = vunpack.c.l.b16 %v383
        %v677 = vunpack.c.h.b16 %v383
        %v678 = vunpack.c.l.b16 %v384
        %v679 = vunpack.c.h.b16 %v384
        %v680 = vunpack.c.l.b16 %v385
        %v681 = vunpack.c.h.b16 %v385
        %v682 = vunpack.c.l.b16 %v386
        %v683 = vunpack.c.h.b16 %v386
        %v684 = vunpack.c.l.b16 %v387
        %v685 = vunpack.c.h.b16 %v387
        %v686 = vunpack.c.l.b16 %v388
        %v687 = vunpack.c.h.b16 %v388
        %v688 = vunpack.c.l.b16 %v389
        %v689 = vunpack.c.h.b16 %v389
        %v690 = vunpack.c.l.b16 %v390
        %v691 = vunpack.c.h.b16 %v390
        %v692 = vunpack.c.l.b16 %v391
        %v693 = vunpack.c.h.b16 %v391
        %v694 = vunpack.c.l.b16 %v392
        %v695 = vunpack.c.h.b16 %v392
        %v696 = vunpack.c.l.b16 %v393
        %v697 = vunpack.c.h.b16 %v393
        %v698 = vunpack.c.l.b16 %v394
        %v699 = vunpack.c.h.b16 %v394
        %v700 = vunpack.c.l.b16 %v395
        %v701 = vunpack.c.h.b16 %v395
        %v702 = vunpack.c.l.b16 %v396
        %v703 = vunpack.c.h.b16 %v396
        %v704 = vunpack.c.l.b16 %v397
        %v705 = vunpack.c.h.b16 %v397
        %v706 = vunpack.c.l.b16 %v398
        %v707 = vunpack.c.h.b16 %v398
        %v708 = vpack.c.b16 %v518, %v516
        %v709 = vpack.c.b16 %v519, %v517
        %v710 = vpack.c.b16 %v522, %v520
        %v711 = vpack.c.b16 %v523, %v521
        %v712 = vpack.c.b16 %v526, %v524
        %v713 = vpack.c.b16 %v527, %v525
        %v714 = vpack.c.b16 %v530, %v528
        %v715 = vpack.c.b16 %v531, %v529
        %v716 = vpack.c.b16 %v534, %v532
        %v717 = vpack.c.b16 %v535, %v533
        %v718 = vpack.c.b16 %v538, %v536
        %v719 = vpack.c.b16 %v539, %v537
        %v720 = vpack.c.b16 %v542, %v540
        %v721 = vpack.c.b16 %v543, %v541
        %v722 = vpack.c.b16 %v546, %v544
        %v723 = vpack.c.b16 %v547, %v545
        %v724 = vpack.c.b16 %v550, %v548
        %v725 = vpack.c.b16 %v551, %v549
        %v726 = vpack.c.b16 %v554, %v552
        %v727 = vpack.c.b16 %v555, %v553
        %v728 = vpack.c.b16 %v558, %v556
        %v729 = vpack.c.b16 %v559, %v557
        %v730 = vpack.c.b16 %v562, %v560
        %v731 = vpack.c.b16 %v563, %v561
        %v732 = vpack.c.b16 %v566, %v564
        %v733 = vpack.c.b16 %v567, %v565
        %v734 = vpack.c.b16 %v570, %v568
        %v735 = vpack.c.b16 %v571, %v569
        %v736 = vpack.c.b16 %v574, %v572
        %v737 = vpack.c.b16 %v575, %v573
        %v738 = vpack.c.b16 %v578, %v576
        %v739 = vpack.c.b16 %v579, %v577
        %v740 = vpack.c.b16 %v582, %v580
        %v741 = vpack.c.b16 %v583, %v581
        %v742 = vpack.c.b16 %v586, %v584
        %v743 = vpack.c.b16 %v587, %v585
        %v744 = vpack.c.b16 %v590, %v588
        %v745 = vpack.c.b16 %v591, %v589
        %v746 = vpack.c.b16 %v594, %v592
        %v747 = vpack.c.b16 %v595, %v593
        %v748 = vpack.c.b16 %v598, %v596
        %v749 = vpack.c.b16 %v599, %v597
        %v750 = vpack.c.b16 %v602, %v600
        %v751 = vpack.c.b16 %v603, %v601
        %v752 = vpack.c.b16 %v606, %v604
        %v753 = vpack.c.b16 %v607, %v605
        %v754 = vpack.c.b16 %v610, %v608
        %v755 = vpack.c.b16 %v611, %v609
        %v756 = vpack.c.b16 %v614, %v612
        %v757 = vpack.c.b16 %v615, %v613
        %v758 = vpack.c.b16 %v618, %v616
        %v759 = vpack.c.b16 %v619, %v617
        %v760 = vpack.c.b16 %v622, %v620
        %v761 = vpack.c.b16 %v623, %v621
        %v762 = vpack.c.b16 %v626, %v624
        %v763 = vpack.c.b16 %v627, %v625
        %v764 = vpack.c.b16 %v630, %v628
        %v765 = vpack.c.b16 %v631, %v629
        %v766 = vpack.c.b16 %v634, %v632
        %v767 = vpack.c.b16 %v635, %v633
        %v768 = vpack.c.b16 %v638, %v636
        %v769 = vpack.c.b16 %v639, %v637
        %v770 = vpack.c.b16 %v642, %v640
        %v771 = vpack.c.b16 %v643, %v641
        %v772 = vpack.c.b16 %v646, %v644
        %v773 = vpack.c.b16 %v647, %v645
        %v774 = vpack.c.b16 %v650, %v648
        %v775 = vpack.c.b16 %v651, %v649
        %v776 = vpack.c.b16 %v654, %v652
        %v777 = vpack.c.b16 %v655, %v653
        %v778 = vpack.c.b16 %v658, %v656
        %v779 = vpack.c.b16 %v659, %v657
        %v780 = vpack.c.b16 %v662, %v660
        %v781 = vpack.c.b16 %v663, %v661
        %v782 = vpack.c.b16 %v666, %v664
        %v783 = vpack.c.b16 %v667, %v665
        %v784 = vpack.c.b16 %v670, %v668
        %v785 = vpack.c.b16 %v671, %v669
        %v786 = vpack.c.b16 %v674, %v672
        %v787 = vpack.c.b16 %v675, %v673
        %v788 = vpack.c.b16 %v678, %v676
        %v789 = vpack.c.b16 %v679, %v677
        %v790 = vpack.c.b16 %v682, %v680
        %v791 = vpack.c.b16 %v683, %v681
        %v792 = vpack.c.b16 %v686, %v684
        %v793 = vpack.c.b16 %v687, %v685
        %v794 = vpack.c.b16 %v690, %v688
        %v795 = vpack.c.b16 %v691, %v689
        %v796 = vpack.c.b16 %v694, %v692
        %v797 = vpack.c.b16 %v695, %v693
        %v798 = vpack.c.b16 %v698, %v696
        %v799 = vpack.c.b16 %v699, %v697
        %v800 = vpack.c.b16 %v702, %v700
        %v801 = vpack.c.b16 %v703, %v701
        %v802 = vpack.c.b16 %v706, %v704
        %v803 = vpack.c.b16 %v707, %v705
        %900 = vmatpush.bf16.msra.mxu0 %v722
        %901 = vmatpush.bf16.msra.mxu0 %v720
        %902 = vmatpush.bf16.msra.mxu0 %v718
        %903 = vmatpush.bf16.msra.mxu0 %v716
        %904 = vmatpush.bf16.msra.mxu0 %v714
        %905 = vmatpush.bf16.msra.mxu0 %v712
        %906 = vmatpush.bf16.msra.mxu0 %v710
        %907 = vmatpush.bf16.msra.mxu0 %v708
        %908 = vmatmul.bf16.gmra.mxu0 %v408
        %v909 = vpop.f32.mrf.mxu0
        %v910 = vadd.f32 0.0, %v909
        %v911 = vpop.f32.mrf.mxu0
        %912 = vdwg.mxu0
        %913 = vmatpush.bf16.msra.mxu0 %v738
        %914 = vmatpush.bf16.msra.mxu0 %v736
        %915 = vmatpush.bf16.msra.mxu0 %v734
        %916 = vmatpush.bf16.msra.mxu0 %v732
        %917 = vmatpush.bf16.msra.mxu0 %v730
        %918 = vmatpush.bf16.msra.mxu0 %v728
        %919 = vmatpush.bf16.msra.mxu0 %v726
        %920 = vmatpush.bf16.msra.mxu0 %v724
        %921 = vmatmul.bf16.gmra.mxu0 %v409
        %v922 = vpop.f32.mrf.mxu0
        %v923 = vadd.f32 %v910, %v922
        %v924 = vpop.f32.mrf.mxu0
        %925 = vdwg.mxu0
        %926 = vmatpush.bf16.msra.mxu0 %v754
        %927 = vmatpush.bf16.msra.mxu0 %v752
        %928 = vmatpush.bf16.msra.mxu0 %v750
        %929 = vmatpush.bf16.msra.mxu0 %v748
        %930 = vmatpush.bf16.msra.mxu0 %v746
        %931 = vmatpush.bf16.msra.mxu0 %v744
        %932 = vmatpush.bf16.msra.mxu0 %v742
        %933 = vmatpush.bf16.msra.mxu0 %v740
        %934 = vmatmul.bf16.gmra.mxu0 %v410
        %v935 = vpop.f32.mrf.mxu0
        %v936 = vadd.f32 %v923, %v935
        %v937 = vpop.f32.mrf.mxu0
        %938 = vdwg.mxu0
        %939 = vmatpush.bf16.msra.mxu0 %v770
        %940 = vmatpush.bf16.msra.mxu0 %v768
        %941 = vmatpush.bf16.msra.mxu0 %v766
        %942 = vmatpush.bf16.msra.mxu0 %v764
        %943 = vmatpush.bf16.msra.mxu0 %v762
        %944 = vmatpush.bf16.msra.mxu0 %v760
        %945 = vmatpush.bf16.msra.mxu0 %v758
        %946 = vmatpush.bf16.msra.mxu0 %v756
        %947 = vmatmul.bf16.gmra.mxu0 %v411
        %v948 = vpop.f32.mrf.mxu0
        %v949 = vadd.f32 %v936, %v948
        %v950 = vpop.f32.mrf.mxu0
        %951 = vdwg.mxu0
        %952 = vmatpush.bf16.msra.mxu0 %v786
        %953 = vmatpush.bf16.msra.mxu0 %v784
        %954 = vmatpush.bf16.msra.mxu0 %v782
        %955 = vmatpush.bf16.msra.mxu0 %v780
        %956 = vmatpush.bf16.msra.mxu0 %v778
        %957 = vmatpush.bf16.msra.mxu0 %v776
        %958 = vmatpush.bf16.msra.mxu0 %v774
        %959 = vmatpush.bf16.msra.mxu0 %v772
        %960 = vmatmul.bf16.gmra.mxu0 %v412
        %v961 = vpop.f32.mrf.mxu0
        %v962 = vadd.f32 %v949, %v961
        %v963 = vpop.f32.mrf.mxu0
        %964 = vdwg.mxu0
        %965 = vmatpush.bf16.msra.mxu0 %v802
        %966 = vmatpush.bf16.msra.mxu0 %v800
        %967 = vmatpush.bf16.msra.mxu0 %v798
        %968 = vmatpush.bf16.msra.mxu0 %v796
        %969 = vmatpush.bf16.msra.mxu0 %v794
        %970 = vmatpush.bf16.msra.mxu0 %v792
        %971 = vmatpush.bf16.msra.mxu0 %v790
        %972 = vmatpush.bf16.msra.mxu0 %v788
        %973 = vmatmul.bf16.gmra.mxu0 %v413
        %v974 = vpop.f32.mrf.mxu0
        %v975 = vadd.f32 %v962, %v974
        %v976 = vpop.f32.mrf.mxu0
        %977 = vdwg.mxu0
        %978 = vmatpush.bf16.msra.mxu0 %v723
        %979 = vmatpush.bf16.msra.mxu0 %v721
        %980 = vmatpush.bf16.msra.mxu0 %v719
        %981 = vmatpush.bf16.msra.mxu0 %v717
        %982 = vmatpush.bf16.msra.mxu0 %v715
        %983 = vmatpush.bf16.msra.mxu0 %v713
        %984 = vmatpush.bf16.msra.mxu0 %v711
        %985 = vmatpush.bf16.msra.mxu0 %v709
        %986 = vmatmul.bf16.gmra.mxu0 %v408
        %v987 = vpop.f32.mrf.mxu0
        %v988 = vadd.f32 0.0, %v987
        %v989 = vpop.f32.mrf.mxu0
        %990 = vdwg.mxu0
        %991 = vmatpush.bf16.msra.mxu0 %v739
        %992 = vmatpush.bf16.msra.mxu0 %v737
        %993 = vmatpush.bf16.msra.mxu0 %v735
        %994 = vmatpush.bf16.msra.mxu0 %v733
        %995 = vmatpush.bf16.msra.mxu0 %v731
        %996 = vmatpush.bf16.msra.mxu0 %v729
        %997 = vmatpush.bf16.msra.mxu0 %v727
        %998 = vmatpush.bf16.msra.mxu0 %v725
        %999 = vmatmul.bf16.gmra.mxu0 %v409
        %v1000 = vpop.f32.mrf.mxu0
        %v1001 = vadd.f32 %v988, %v1000
        %v1002 = vpop.f32.mrf.mxu0
        %1003 = vdwg.mxu0
        %1004 = vmatpush.bf16.msra.mxu0 %v755
        %1005 = vmatpush.bf16.msra.mxu0 %v753
        %1006 = vmatpush.bf16.msra.mxu0 %v751
        %1007 = vmatpush.bf16.msra.mxu0 %v749
        %1008 = vmatpush.bf16.msra.mxu0 %v747
        %1009 = vmatpush.bf16.msra.mxu0 %v745
        %1010 = vmatpush.bf16.msra.mxu0 %v743
        %1011 = vmatpush.bf16.msra.mxu0 %v741
        %1012 = vmatmul.bf16.gmra.mxu0 %v410
        %v1013 = vpop.f32.mrf.mxu0
        %v1014 = vadd.f32 %v1001, %v1013
        %v1015 = vpop.f32.mrf.mxu0
        %1016 = vdwg.mxu0
        %1017 = vmatpush.bf16.msra.mxu0 %v771
        %1018 = vmatpush.bf16.msra.mxu0 %v769
        %1019 = vmatpush.bf16.msra.mxu0 %v767
        %1020 = vmatpush.bf16.msra.mxu0 %v765
        %1021 = vmatpush.bf16.msra.mxu0 %v763
        %1022 = vmatpush.bf16.msra.mxu0 %v761
        %1023 = vmatpush.bf16.msra.mxu0 %v759
        %1024 = vmatpush.bf16.msra.mxu0 %v757
        %1025 = vmatmul.bf16.gmra.mxu0 %v411
        %v1026 = vpop.f32.mrf.mxu0
        %v1027 = vadd.f32 %v1014, %v1026
        %v1028 = vpop.f32.mrf.mxu0
        %1029 = vdwg.mxu0
        %1030 = vmatpush.bf16.msra.mxu0 %v787
        %1031 = vmatpush.bf16.msra.mxu0 %v785
        %1032 = vmatpush.bf16.msra.mxu0 %v783
        %1033 = vmatpush.bf16.msra.mxu0 %v781
        %1034 = vmatpush.bf16.msra.mxu0 %v779
        %1035 = vmatpush.bf16.msra.mxu0 %v777
        %1036 = vmatpush.bf16.msra.mxu0 %v775
        %1037 = vmatpush.bf16.msra.mxu0 %v773
        %1038 = vmatmul.bf16.gmra.mxu0 %v412
        %v1039 = vpop.f32.mrf.mxu0
        %v1040 = vadd.f32 %v1027, %v1039
        %v1041 = vpop.f32.mrf.mxu0
        %1042 = vdwg.mxu0
        %1043 = vmatpush.bf16.msra.mxu0 %v803
        %1044 = vmatpush.bf16.msra.mxu0 %v801
        %1045 = vmatpush.bf16.msra.mxu0 %v799
        %1046 = vmatpush.bf16.msra.mxu0 %v797
        %1047 = vmatpush.bf16.msra.mxu0 %v795
        %1048 = vmatpush.bf16.msra.mxu0 %v793
        %1049 = vmatpush.bf16.msra.mxu0 %v791
        %1050 = vmatpush.bf16.msra.mxu0 %v789
        %1051 = vmatmul.bf16.gmra.mxu0 %v413
        %v1052 = vpop.f32.mrf.mxu0
        %v1053 = vadd.f32 %v1040, %v1052
        %v1054 = vpop.f32.mrf.mxu0
        %1055 = vdwg.mxu0
        %v1056 = vpack.c.bf16 %v975, %v975
        %v1057 = vpack.c.bf16 %v1053, %v1053
        %v1058 = vld [vmem:[%s2] sm:$0xff]
        %v1059 = vld [vmem:[%s2 + $0x8] sm:$0xff]
        %v1060 = vld [vmem:[%s2 + $0x10] sm:$0xff]
        %v1061 = vld [vmem:[%s2 + $0x18] sm:$0xff]
        %v1062 = vld [vmem:[%s2 + $0x20] sm:$0xff]
        %v1063 = vld [vmem:[%s2 + $0x28] sm:$0xff]
        %v1064 = vld [vmem:[%s2 + $0x30] sm:$0xff]
        %v1065 = vld [vmem:[%s2 + $0x38] sm:$0xff]
        %v1066 = vld [vmem:[%s2 + $0x40] sm:$0xff]
        %v1067 = vld [vmem:[%s2 + $0x48] sm:$0xff]
        %v1068 = vld [vmem:[%s2 + $0x50] sm:$0xff]
        %v1069 = vld [vmem:[%s2 + $0x58] sm:$0xff]
        %v1070 = vld [vmem:[%s2 + $0x60] sm:$0xff]
        %v1071 = vld [vmem:[%s2 + $0x68] sm:$0xff]
        %v1072 = vld [vmem:[%s2 + $0x70] sm:$0xff]
        %v1073 = vld [vmem:[%s2 + $0x78] sm:$0xff]
        %v1074 = vld [vmem:[%s2 + $0x80] sm:$0xff]
        %v1075 = vld [vmem:[%s2 + $0x88] sm:$0xff]
        %v1076 = vld [vmem:[%s2 + $0x90] sm:$0xff]
        %v1077 = vld [vmem:[%s2 + $0x98] sm:$0xff]
        %v1078 = vld [vmem:[%s2 + $0xa0] sm:$0xff]
        %v1079 = vld [vmem:[%s2 + $0xa8] sm:$0xff]
        %v1080 = vld [vmem:[%s2 + $0xb0] sm:$0xff]
        %v1081 = vld [vmem:[%s2 + $0xb8] sm:$0xff]
        %v1082 = vld [vmem:[%s2 + $0xc0] sm:$0xff]
        %v1083 = vld [vmem:[%s2 + $0xc8] sm:$0xff]
        %v1084 = vld [vmem:[%s2 + $0xd0] sm:$0xff]
        %v1085 = vld [vmem:[%s2 + $0xd8] sm:$0xff]
        %v1086 = vld [vmem:[%s2 + $0xe0] sm:$0xff]
        %v1087 = vld [vmem:[%s2 + $0xe8] sm:$0xff]
        %v1088 = vld [vmem:[%s2 + $0xf0] sm:$0xff]
        %v1089 = vld [vmem:[%s2 + $0xf8] sm:$0xff]
        %v1090 = vld [vmem:[%s2 + $0x100] sm:$0xff]
        %v1091 = vld [vmem:[%s2 + $0x108] sm:$0xff]
        %v1092 = vld [vmem:[%s2 + $0x110] sm:$0xff]
        %v1093 = vld [vmem:[%s2 + $0x118] sm:$0xff]
        %v1094 = vld [vmem:[%s2 + $0x120] sm:$0xff]
        %v1095 = vld [vmem:[%s2 + $0x128] sm:$0xff]
        %v1096 = vld [vmem:[%s2 + $0x130] sm:$0xff]
        %v1097 = vld [vmem:[%s2 + $0x138] sm:$0xff]
        %v1098 = vld [vmem:[%s2 + $0x140] sm:$0xff]
        %v1099 = vld [vmem:[%s2 + $0x148] sm:$0xff]
        %v1100 = vld [vmem:[%s2 + $0x150] sm:$0xff]
        %v1101 = vld [vmem:[%s2 + $0x158] sm:$0xff]
        %v1102 = vld [vmem:[%s2 + $0x160] sm:$0xff]
        %v1103 = vld [vmem:[%s2 + $0x168] sm:$0xff]
        %v1104 = vld [vmem:[%s2 + $0x170] sm:$0xff]
        %v1105 = vld [vmem:[%s2 + $0x178] sm:$0xff]
        %v1106 = vld [vmem:[%s2 + $0x180] sm:$0xff]
        %v1107 = vld [vmem:[%s2 + $0x188] sm:$0xff]
        %v1108 = vld [vmem:[%s2 + $0x190] sm:$0xff]
        %v1109 = vld [vmem:[%s2 + $0x198] sm:$0xff]
        %v1110 = vld [vmem:[%s2 + $0x1a0] sm:$0xff]
        %v1111 = vld [vmem:[%s2 + $0x1a8] sm:$0xff]
        %v1112 = vld [vmem:[%s2 + $0x1b0] sm:$0xff]
        %v1113 = vld [vmem:[%s2 + $0x1b8] sm:$0xff]
        %v1114 = vld [vmem:[%s2 + $0x1c0] sm:$0xff]
        %v1115 = vld [vmem:[%s2 + $0x1c8] sm:$0xff]
        %v1116 = vld [vmem:[%s2 + $0x1d0] sm:$0xff]
        %v1117 = vld [vmem:[%s2 + $0x1d8] sm:$0xff]
        %v1118 = vld [vmem:[%s2 + $0x1e0] sm:$0xff]
        %v1119 = vld [vmem:[%s2 + $0x1e8] sm:$0xff]
        %v1120 = vld [vmem:[%s2 + $0x1f0] sm:$0xff]
        %v1121 = vld [vmem:[%s2 + $0x1f8] sm:$0xff]
        %v1122 = vld [vmem:[%s2 + $0x200] sm:$0xff]
        %v1123 = vld [vmem:[%s2 + $0x208] sm:$0xff]
        %v1124 = vld [vmem:[%s2 + $0x210] sm:$0xff]
        %v1125 = vld [vmem:[%s2 + $0x218] sm:$0xff]
        %v1126 = vld [vmem:[%s2 + $0x220] sm:$0xff]
        %v1127 = vld [vmem:[%s2 + $0x228] sm:$0xff]
        %v1128 = vld [vmem:[%s2 + $0x230] sm:$0xff]
        %v1129 = vld [vmem:[%s2 + $0x238] sm:$0xff]
        %v1130 = vld [vmem:[%s3] sm:$0x3f]
        %v1132 = vperm.slane %v1130, 0
        %v1133 = vperm.slane %v1130, 1
        %v1134 = vperm.slane %v1130, 2
        %v1135 = vperm.slane %v1130, 3
        %v1136 = vperm.slane %v1130, 4
        %v1137 = vperm.slane %v1130, 5
        %v1216 = vunpack.c.l.b16 %v1058
        %v1217 = vunpack.c.h.b16 %v1058
        %v1218 = vunpack.c.l.b16 %v1059
        %v1219 = vunpack.c.h.b16 %v1059
        %v1220 = vunpack.c.l.b16 %v1060
        %v1221 = vunpack.c.h.b16 %v1060
        %v1222 = vunpack.c.l.b16 %v1061
        %v1223 = vunpack.c.h.b16 %v1061
        %v1224 = vunpack.c.l.b16 %v1062
        %v1225 = vunpack.c.h.b16 %v1062
        %v1226 = vunpack.c.l.b16 %v1063
        %v1227 = vunpack.c.h.b16 %v1063
        %v1228 = vunpack.c.l.b16 %v1064
        %v1229 = vunpack.c.h.b16 %v1064
        %v1230 = vunpack.c.l.b16 %v1065
        %v1231 = vunpack.c.h.b16 %v1065
        %v1232 = vunpack.c.l.b16 %v1066
        %v1233 = vunpack.c.h.b16 %v1066
        %v1234 = vunpack.c.l.b16 %v1067
        %v1235 = vunpack.c.h.b16 %v1067
        %v1236 = vunpack.c.l.b16 %v1068
        %v1237 = vunpack.c.h.b16 %v1068
        %v1238 = vunpack.c.l.b16 %v1069
        %v1239 = vunpack.c.h.b16 %v1069
        %v1240 = vunpack.c.l.b16 %v1070
        %v1241 = vunpack.c.h.b16 %v1070
        %v1242 = vunpack.c.l.b16 %v1071
        %v1243 = vunpack.c.h.b16 %v1071
        %v1244 = vunpack.c.l.b16 %v1072
        %v1245 = vunpack.c.h.b16 %v1072
        %v1246 = vunpack.c.l.b16 %v1073
        %v1247 = vunpack.c.h.b16 %v1073
        %v1248 = vunpack.c.l.b16 %v1074
        %v1249 = vunpack.c.h.b16 %v1074
        %v1250 = vunpack.c.l.b16 %v1075
        %v1251 = vunpack.c.h.b16 %v1075
        %v1252 = vunpack.c.l.b16 %v1076
        %v1253 = vunpack.c.h.b16 %v1076
        %v1254 = vunpack.c.l.b16 %v1077
        %v1255 = vunpack.c.h.b16 %v1077
        %v1256 = vunpack.c.l.b16 %v1078
        %v1257 = vunpack.c.h.b16 %v1078
        %v1258 = vunpack.c.l.b16 %v1079
        %v1259 = vunpack.c.h.b16 %v1079
        %v1260 = vunpack.c.l.b16 %v1080
        %v1261 = vunpack.c.h.b16 %v1080
        %v1262 = vunpack.c.l.b16 %v1081
        %v1263 = vunpack.c.h.b16 %v1081
        %v1264 = vunpack.c.l.b16 %v1082
        %v1265 = vunpack.c.h.b16 %v1082
        %v1266 = vunpack.c.l.b16 %v1083
        %v1267 = vunpack.c.h.b16 %v1083
        %v1268 = vunpack.c.l.b16 %v1084
        %v1269 = vunpack.c.h.b16 %v1084
        %v1270 = vunpack.c.l.b16 %v1085
        %v1271 = vunpack.c.h.b16 %v1085
        %v1272 = vunpack.c.l.b16 %v1086
        %v1273 = vunpack.c.h.b16 %v1086
        %v1274 = vunpack.c.l.b16 %v1087
        %v1275 = vunpack.c.h.b16 %v1087
        %v1276 = vunpack.c.l.b16 %v1088
        %v1277 = vunpack.c.h.b16 %v1088
        %v1278 = vunpack.c.l.b16 %v1089
        %v1279 = vunpack.c.h.b16 %v1089
        %v1280 = vunpack.c.l.b16 %v1090
        %v1281 = vunpack.c.h.b16 %v1090
        %v1282 = vunpack.c.l.b16 %v1091
        %v1283 = vunpack.c.h.b16 %v1091
        %v1284 = vunpack.c.l.b16 %v1092
        %v1285 = vunpack.c.h.b16 %v1092
        %v1286 = vunpack.c.l.b16 %v1093
        %v1287 = vunpack.c.h.b16 %v1093
        %v1288 = vunpack.c.l.b16 %v1094
        %v1289 = vunpack.c.h.b16 %v1094
        %v1290 = vunpack.c.l.b16 %v1095
        %v1291 = vunpack.c.h.b16 %v1095
        %v1292 = vunpack.c.l.b16 %v1096
        %v1293 = vunpack.c.h.b16 %v1096
        %v1294 = vunpack.c.l.b16 %v1097
        %v1295 = vunpack.c.h.b16 %v1097
        %v1296 = vunpack.c.l.b16 %v1098
        %v1297 = vunpack.c.h.b16 %v1098
        %v1298 = vunpack.c.l.b16 %v1099
        %v1299 = vunpack.c.h.b16 %v1099
        %v1300 = vunpack.c.l.b16 %v1100
        %v1301 = vunpack.c.h.b16 %v1100
        %v1302 = vunpack.c.l.b16 %v1101
        %v1303 = vunpack.c.h.b16 %v1101
        %v1304 = vunpack.c.l.b16 %v1102
        %v1305 = vunpack.c.h.b16 %v1102
        %v1306 = vunpack.c.l.b16 %v1103
        %v1307 = vunpack.c.h.b16 %v1103
        %v1308 = vunpack.c.l.b16 %v1104
        %v1309 = vunpack.c.h.b16 %v1104
        %v1310 = vunpack.c.l.b16 %v1105
        %v1311 = vunpack.c.h.b16 %v1105
        %v1312 = vunpack.c.l.b16 %v1106
        %v1313 = vunpack.c.h.b16 %v1106
        %v1314 = vunpack.c.l.b16 %v1107
        %v1315 = vunpack.c.h.b16 %v1107
        %v1316 = vunpack.c.l.b16 %v1108
        %v1317 = vunpack.c.h.b16 %v1108
        %v1318 = vunpack.c.l.b16 %v1109
        %v1319 = vunpack.c.h.b16 %v1109
        %v1320 = vunpack.c.l.b16 %v1110
        %v1321 = vunpack.c.h.b16 %v1110
        %v1322 = vunpack.c.l.b16 %v1111
        %v1323 = vunpack.c.h.b16 %v1111
        %v1324 = vunpack.c.l.b16 %v1112
        %v1325 = vunpack.c.h.b16 %v1112
        %v1326 = vunpack.c.l.b16 %v1113
        %v1327 = vunpack.c.h.b16 %v1113
        %v1328 = vunpack.c.l.b16 %v1114
        %v1329 = vunpack.c.h.b16 %v1114
        %v1330 = vunpack.c.l.b16 %v1115
        %v1331 = vunpack.c.h.b16 %v1115
        %v1332 = vunpack.c.l.b16 %v1116
        %v1333 = vunpack.c.h.b16 %v1116
        %v1334 = vunpack.c.l.b16 %v1117
        %v1335 = vunpack.c.h.b16 %v1117
        %v1336 = vunpack.c.l.b16 %v1118
        %v1337 = vunpack.c.h.b16 %v1118
        %v1338 = vunpack.c.l.b16 %v1119
        %v1339 = vunpack.c.h.b16 %v1119
        %v1340 = vunpack.c.l.b16 %v1120
        %v1341 = vunpack.c.h.b16 %v1120
        %v1342 = vunpack.c.l.b16 %v1121
        %v1343 = vunpack.c.h.b16 %v1121
        %v1344 = vunpack.c.l.b16 %v1122
        %v1345 = vunpack.c.h.b16 %v1122
        %v1346 = vunpack.c.l.b16 %v1123
        %v1347 = vunpack.c.h.b16 %v1123
        %v1348 = vunpack.c.l.b16 %v1124
        %v1349 = vunpack.c.h.b16 %v1124
        %v1350 = vunpack.c.l.b16 %v1125
        %v1351 = vunpack.c.h.b16 %v1125
        %v1352 = vunpack.c.l.b16 %v1126
        %v1353 = vunpack.c.h.b16 %v1126
        %v1354 = vunpack.c.l.b16 %v1127
        %v1355 = vunpack.c.h.b16 %v1127
        %v1356 = vunpack.c.l.b16 %v1128
        %v1357 = vunpack.c.h.b16 %v1128
        %v1358 = vunpack.c.l.b16 %v1129
        %v1359 = vunpack.c.h.b16 %v1129
        %v1360 = vpack.c.b16 %v1222, %v1216
        %v1361 = vpack.c.b16 %v1223, %v1217
        %v1362 = vpack.c.b16 %v1224, %v1218
        %v1363 = vpack.c.b16 %v1225, %v1219
        %v1364 = vpack.c.b16 %v1226, %v1220
        %v1365 = vpack.c.b16 %v1227, %v1221
        %v1366 = vpack.c.b16 %v1234, %v1228
        %v1367 = vpack.c.b16 %v1235, %v1229
        %v1368 = vpack.c.b16 %v1236, %v1230
        %v1369 = vpack.c.b16 %v1237, %v1231
        %v1370 = vpack.c.b16 %v1238, %v1232
        %v1371 = vpack.c.b16 %v1239, %v1233
        %v1372 = vpack.c.b16 %v1246, %v1240
        %v1373 = vpack.c.b16 %v1247, %v1241
        %v1374 = vpack.c.b16 %v1248, %v1242
        %v1375 = vpack.c.b16 %v1249, %v1243
        %v1376 = vpack.c.b16 %v1250, %v1244
        %v1377 = vpack.c.b16 %v1251, %v1245
        %v1378 = vpack.c.b16 %v1258, %v1252
        %v1379 = vpack.c.b16 %v1259, %v1253
        %v1380 = vpack.c.b16 %v1260, %v1254
        %v1381 = vpack.c.b16 %v1261, %v1255
        %v1382 = vpack.c.b16 %v1262, %v1256
        %v1383 = vpack.c.b16 %v1263, %v1257
        %v1384 = vpack.c.b16 %v1270, %v1264
        %v1385 = vpack.c.b16 %v1271, %v1265
        %v1386 = vpack.c.b16 %v1272, %v1266
        %v1387 = vpack.c.b16 %v1273, %v1267
        %v1388 = vpack.c.b16 %v1274, %v1268
        %v1389 = vpack.c.b16 %v1275, %v1269
        %v1390 = vpack.c.b16 %v1282, %v1276
        %v1391 = vpack.c.b16 %v1283, %v1277
        %v1392 = vpack.c.b16 %v1284, %v1278
        %v1393 = vpack.c.b16 %v1285, %v1279
        %v1394 = vpack.c.b16 %v1286, %v1280
        %v1395 = vpack.c.b16 %v1287, %v1281
        %v1396 = vpack.c.b16 %v1294, %v1288
        %v1397 = vpack.c.b16 %v1295, %v1289
        %v1398 = vpack.c.b16 %v1296, %v1290
        %v1399 = vpack.c.b16 %v1297, %v1291
        %v1400 = vpack.c.b16 %v1298, %v1292
        %v1401 = vpack.c.b16 %v1299, %v1293
        %v1402 = vpack.c.b16 %v1306, %v1300
        %v1403 = vpack.c.b16 %v1307, %v1301
        %v1404 = vpack.c.b16 %v1308, %v1302
        %v1405 = vpack.c.b16 %v1309, %v1303
        %v1406 = vpack.c.b16 %v1310, %v1304
        %v1407 = vpack.c.b16 %v1311, %v1305
        %v1408 = vpack.c.b16 %v1318, %v1312
        %v1409 = vpack.c.b16 %v1319, %v1313
        %v1410 = vpack.c.b16 %v1320, %v1314
        %v1411 = vpack.c.b16 %v1321, %v1315
        %v1412 = vpack.c.b16 %v1322, %v1316
        %v1413 = vpack.c.b16 %v1323, %v1317
        %v1414 = vpack.c.b16 %v1330, %v1324
        %v1415 = vpack.c.b16 %v1331, %v1325
        %v1416 = vpack.c.b16 %v1332, %v1326
        %v1417 = vpack.c.b16 %v1333, %v1327
        %v1418 = vpack.c.b16 %v1334, %v1328
        %v1419 = vpack.c.b16 %v1335, %v1329
        %v1420 = vpack.c.b16 %v1342, %v1336
        %v1421 = vpack.c.b16 %v1343, %v1337
        %v1422 = vpack.c.b16 %v1344, %v1338
        %v1423 = vpack.c.b16 %v1345, %v1339
        %v1424 = vpack.c.b16 %v1346, %v1340
        %v1425 = vpack.c.b16 %v1347, %v1341
        %v1426 = vpack.c.b16 %v1354, %v1348
        %v1427 = vpack.c.b16 %v1355, %v1349
        %v1428 = vpack.c.b16 %v1356, %v1350
        %v1429 = vpack.c.b16 %v1357, %v1351
        %v1430 = vpack.c.b16 %v1358, %v1352
        %v1431 = vpack.c.b16 %v1359, %v1353
        %vm1504 = vcmask 523264
        %v1506 = vsel %vm1504, %v1057, 0
        %1508 = vmatpush.bf16.msra.mxu0 %v1402
        %1509 = vmatpush.bf16.msra.mxu0 %v1396
        %1510 = vmatpush.bf16.msra.mxu0 %v1390
        %1511 = vmatpush.bf16.msra.mxu0 %v1384
        %1512 = vmatpush.bf16.msra.mxu0 %v1378
        %1513 = vmatpush.bf16.msra.mxu0 %v1372
        %1514 = vmatpush.bf16.msra.mxu0 %v1366
        %1515 = vmatpush.bf16.msra.mxu0 %v1360
        %1516 = vmatmul.bf16.gmra.mxu0 %v1056
        %v1517 = vpop.f32.mrf.mxu0
        %v1518 = vadd.f32 %v1132, %v1517
        %v1519 = vpop.f32.mrf.mxu0
        %1520 = vdwg.mxu0
        %1521 = vmatpush.bf16.msra.mxu0 0
        %1522 = vmatpush.bf16.msra.mxu0 0
        %1523 = vmatpush.bf16.msra.mxu0 0
        %1524 = vmatpush.bf16.msra.mxu0 0
        %1525 = vmatpush.bf16.msra.mxu0 %v1426
        %1526 = vmatpush.bf16.msra.mxu0 %v1420
        %1527 = vmatpush.bf16.msra.mxu0 %v1414
        %1528 = vmatpush.bf16.msra.mxu0 %v1408
        %1529 = vmatmul.bf16.gmra.mxu0 %v1506
        %v1530 = vpop.f32.mrf.mxu0
        %v1531 = vadd.f32 %v1518, %v1530
        %v1532 = vpop.f32.mrf.mxu0
        %1533 = vdwg.mxu0
        %1534 = vmatpush.bf16.msra.mxu0 %v1403
        %1535 = vmatpush.bf16.msra.mxu0 %v1397
        %1536 = vmatpush.bf16.msra.mxu0 %v1391
        %1537 = vmatpush.bf16.msra.mxu0 %v1385
        %1538 = vmatpush.bf16.msra.mxu0 %v1379
        %1539 = vmatpush.bf16.msra.mxu0 %v1373
        %1540 = vmatpush.bf16.msra.mxu0 %v1367
        %1541 = vmatpush.bf16.msra.mxu0 %v1361
        %1542 = vmatmul.bf16.gmra.mxu0 %v1056
        %v1543 = vpop.f32.mrf.mxu0
        %v1544 = vadd.f32 %v1133, %v1543
        %v1545 = vpop.f32.mrf.mxu0
        %1546 = vdwg.mxu0
        %1547 = vmatpush.bf16.msra.mxu0 0
        %1548 = vmatpush.bf16.msra.mxu0 0
        %1549 = vmatpush.bf16.msra.mxu0 0
        %1550 = vmatpush.bf16.msra.mxu0 0
        %1551 = vmatpush.bf16.msra.mxu0 %v1427
        %1552 = vmatpush.bf16.msra.mxu0 %v1421
        %1553 = vmatpush.bf16.msra.mxu0 %v1415
        %1554 = vmatpush.bf16.msra.mxu0 %v1409
        %1555 = vmatmul.bf16.gmra.mxu0 %v1506
        %v1556 = vpop.f32.mrf.mxu0
        %v1557 = vadd.f32 %v1544, %v1556
        %v1558 = vpop.f32.mrf.mxu0
        %1559 = vdwg.mxu0
        %1560 = vmatpush.bf16.msra.mxu0 %v1404
        %1561 = vmatpush.bf16.msra.mxu0 %v1398
        %1562 = vmatpush.bf16.msra.mxu0 %v1392
        %1563 = vmatpush.bf16.msra.mxu0 %v1386
        %1564 = vmatpush.bf16.msra.mxu0 %v1380
        %1565 = vmatpush.bf16.msra.mxu0 %v1374
        %1566 = vmatpush.bf16.msra.mxu0 %v1368
        %1567 = vmatpush.bf16.msra.mxu0 %v1362
        %1568 = vmatmul.bf16.gmra.mxu0 %v1056
        %v1569 = vpop.f32.mrf.mxu0
        %v1570 = vadd.f32 %v1134, %v1569
        %v1571 = vpop.f32.mrf.mxu0
        %1572 = vdwg.mxu0
        %1573 = vmatpush.bf16.msra.mxu0 0
        %1574 = vmatpush.bf16.msra.mxu0 0
        %1575 = vmatpush.bf16.msra.mxu0 0
        %1576 = vmatpush.bf16.msra.mxu0 0
        %1577 = vmatpush.bf16.msra.mxu0 %v1428
        %1578 = vmatpush.bf16.msra.mxu0 %v1422
        %1579 = vmatpush.bf16.msra.mxu0 %v1416
        %1580 = vmatpush.bf16.msra.mxu0 %v1410
        %1581 = vmatmul.bf16.gmra.mxu0 %v1506
        %v1582 = vpop.f32.mrf.mxu0
        %v1583 = vadd.f32 %v1570, %v1582
        %v1584 = vpop.f32.mrf.mxu0
        %1585 = vdwg.mxu0
        %1586 = vmatpush.bf16.msra.mxu0 %v1405
        %1587 = vmatpush.bf16.msra.mxu0 %v1399
        %1588 = vmatpush.bf16.msra.mxu0 %v1393
        %1589 = vmatpush.bf16.msra.mxu0 %v1387
        %1590 = vmatpush.bf16.msra.mxu0 %v1381
        %1591 = vmatpush.bf16.msra.mxu0 %v1375
        %1592 = vmatpush.bf16.msra.mxu0 %v1369
        %1593 = vmatpush.bf16.msra.mxu0 %v1363
        %1594 = vmatmul.bf16.gmra.mxu0 %v1056
        %v1595 = vpop.f32.mrf.mxu0
        %v1596 = vadd.f32 %v1135, %v1595
        %v1597 = vpop.f32.mrf.mxu0
        %1598 = vdwg.mxu0
        %1599 = vmatpush.bf16.msra.mxu0 0
        %1600 = vmatpush.bf16.msra.mxu0 0
        %1601 = vmatpush.bf16.msra.mxu0 0
        %1602 = vmatpush.bf16.msra.mxu0 0
        %1603 = vmatpush.bf16.msra.mxu0 %v1429
        %1604 = vmatpush.bf16.msra.mxu0 %v1423
        %1605 = vmatpush.bf16.msra.mxu0 %v1417
        %1606 = vmatpush.bf16.msra.mxu0 %v1411
        %1607 = vmatmul.bf16.gmra.mxu0 %v1506
        %v1608 = vpop.f32.mrf.mxu0
        %v1609 = vadd.f32 %v1596, %v1608
        %v1610 = vpop.f32.mrf.mxu0
        %1611 = vdwg.mxu0
        %1612 = vmatpush.bf16.msra.mxu0 %v1406
        %1613 = vmatpush.bf16.msra.mxu0 %v1400
        %1614 = vmatpush.bf16.msra.mxu0 %v1394
        %1615 = vmatpush.bf16.msra.mxu0 %v1388
        %1616 = vmatpush.bf16.msra.mxu0 %v1382
        %1617 = vmatpush.bf16.msra.mxu0 %v1376
        %1618 = vmatpush.bf16.msra.mxu0 %v1370
        %1619 = vmatpush.bf16.msra.mxu0 %v1364
        %1620 = vmatmul.bf16.gmra.mxu0 %v1056
        %v1621 = vpop.f32.mrf.mxu0
        %v1622 = vadd.f32 %v1136, %v1621
        %v1623 = vpop.f32.mrf.mxu0
        %1624 = vdwg.mxu0
        %1625 = vmatpush.bf16.msra.mxu0 0
        %1626 = vmatpush.bf16.msra.mxu0 0
        %1627 = vmatpush.bf16.msra.mxu0 0
        %1628 = vmatpush.bf16.msra.mxu0 0
        %1629 = vmatpush.bf16.msra.mxu0 %v1430
        %1630 = vmatpush.bf16.msra.mxu0 %v1424
        %1631 = vmatpush.bf16.msra.mxu0 %v1418
        %1632 = vmatpush.bf16.msra.mxu0 %v1412
        %1633 = vmatmul.bf16.gmra.mxu0 %v1506
        %v1634 = vpop.f32.mrf.mxu0
        %v1635 = vadd.f32 %v1622, %v1634
        %v1636 = vpop.f32.mrf.mxu0
        %1637 = vdwg.mxu0
        %1638 = vmatpush.bf16.msra.mxu0 %v1407
        %1639 = vmatpush.bf16.msra.mxu0 %v1401
        %1640 = vmatpush.bf16.msra.mxu0 %v1395
        %1641 = vmatpush.bf16.msra.mxu0 %v1389
        %1642 = vmatpush.bf16.msra.mxu0 %v1383
        %1643 = vmatpush.bf16.msra.mxu0 %v1377
        %1644 = vmatpush.bf16.msra.mxu0 %v1371
        %1645 = vmatpush.bf16.msra.mxu0 %v1365
        %1646 = vmatmul.bf16.gmra.mxu0 %v1056
        %v1647 = vpop.f32.mrf.mxu0
        %v1648 = vadd.f32 %v1137, %v1647
        %v1649 = vpop.f32.mrf.mxu0
        %1650 = vdwg.mxu0
        %1651 = vmatpush.bf16.msra.mxu0 0
        %1652 = vmatpush.bf16.msra.mxu0 0
        %1653 = vmatpush.bf16.msra.mxu0 0
        %1654 = vmatpush.bf16.msra.mxu0 0
        %1655 = vmatpush.bf16.msra.mxu0 %v1431
        %1656 = vmatpush.bf16.msra.mxu0 %v1425
        %1657 = vmatpush.bf16.msra.mxu0 %v1419
        %1658 = vmatpush.bf16.msra.mxu0 %v1413
        %1659 = vmatmul.bf16.gmra.mxu0 %v1506
        %v1660 = vpop.f32.mrf.mxu0
        %v1661 = vadd.f32 %v1648, %v1660
        %v1662 = vpop.f32.mrf.mxu0
        %1663 = vdwg.mxu0
        %v1664 = vmul.f32 %v1531, 0.95
        %v1665 = vmul.f32 %v1557, 0.95
        %v1666 = vmul.f32 %v1583, 0.95
        %v1667 = vmul.f32 %v1609, 0.95
        %v1668 = vmul.f32 %v1635, 0.95
        %v1669 = vmul.f32 %v1661, 0.95
        %v1670 = vunpack.c.l.bf16 %v300
        %v1671 = vunpack.c.h.bf16 %v300
        %v1672 = vunpack.c.l.bf16 %v301
        %v1673 = vunpack.c.h.bf16 %v301
        %v1674 = vunpack.c.l.bf16 %v302
        %v1675 = vunpack.c.h.bf16 %v302
        %v1676 = vmul.f32 %v1670, 0.05
        %v1677 = vmul.f32 %v1671, 0.05
        %v1678 = vmul.f32 %v1672, 0.05
        %v1679 = vmul.f32 %v1673, 0.05
        %v1680 = vmul.f32 %v1674, 0.05
        %v1681 = vmul.f32 %v1675, 0.05
        %v1682 = vadd.f32 %v1664, %v1676
        %v1683 = vadd.f32 %v1665, %v1677
        %v1684 = vadd.f32 %v1666, %v1678
        %v1685 = vadd.f32 %v1667, %v1679
        %v1686 = vadd.f32 %v1668, %v1680
        %v1687 = vadd.f32 %v1669, %v1681
        %1688 = vst [vmem:[%s271] sm:$0xff] %v1682
        %1689 = vst [vmem:[%s271 + $0x8] sm:$0xff] %v1683
        %1690 = vst [vmem:[%s271 + $0x10] sm:$0xff] %v1684
        %1691 = vst [vmem:[%s271 + $0x18] sm:$0xff] %v1685
        %1692 = vst [vmem:[%s271 + $0x20] sm:$0xff] %v1686
        %1693 = vst [vmem:[%s271 + $0x28] sm:$0xff] %v1687
        %v1694 = vld [vmem:[%s4] sm:$0xff]
        %v1695 = vld [vmem:[%s4 + $0x8] sm:$0xff]
        %v1696 = vld [vmem:[%s4 + $0x10] sm:$0xff]
        %v1697 = vld [vmem:[%s4 + $0x18] sm:$0xff]
        %v1698 = vld [vmem:[%s4 + $0x20] sm:$0xff]
        %v1699 = vld [vmem:[%s4 + $0x28] sm:$0xff]
        %v1700 = vld [vmem:[%s4 + $0x30] sm:$0xff]
        %v1701 = vld [vmem:[%s4 + $0x38] sm:$0xff]
        %v1702 = vld [vmem:[%s4 + $0x40] sm:$0xff]
        %v1703 = vld [vmem:[%s4 + $0x48] sm:$0xff]
        %v1704 = vld [vmem:[%s4 + $0x50] sm:$0xff]
        %v1705 = vld [vmem:[%s4 + $0x58] sm:$0xff]
        %v1706 = vld [vmem:[%s4 + $0x60] sm:$0xff]
        %v1707 = vld [vmem:[%s4 + $0x68] sm:$0xff]
        %v1708 = vld [vmem:[%s4 + $0x70] sm:$0xff]
        %v1709 = vld [vmem:[%s4 + $0x78] sm:$0xff]
        %v1710 = vld [vmem:[%s4 + $0x80] sm:$0xff]
        %v1711 = vld [vmem:[%s4 + $0x88] sm:$0xff]
        %v1712 = vld [vmem:[%s4 + $0x90] sm:$0xff]
        %v1713 = vld [vmem:[%s4 + $0x98] sm:$0xff]
        %v1714 = vld [vmem:[%s4 + $0xa0] sm:$0xff]
        %v1715 = vld [vmem:[%s4 + $0xa8] sm:$0xff]
        %v1716 = vld [vmem:[%s4 + $0xb0] sm:$0xff]
        %v1717 = vld [vmem:[%s4 + $0xb8] sm:$0xff]
        %v1718 = vld [vmem:[%s4 + $0xc0] sm:$0xff]
        %v1719 = vld [vmem:[%s4 + $0xc8] sm:$0xff]
        %v1720 = vld [vmem:[%s4 + $0xd0] sm:$0xff]
        %v1721 = vld [vmem:[%s4 + $0xd8] sm:$0xff]
        %v1722 = vld [vmem:[%s4 + $0xe0] sm:$0xff]
        %v1723 = vld [vmem:[%s4 + $0xe8] sm:$0xff]
        %v1724 = vld [vmem:[%s4 + $0xf0] sm:$0xff]
        %v1725 = vld [vmem:[%s4 + $0xf8] sm:$0xff]
        %v1726 = vld [vmem:[%s4 + $0x100] sm:$0xff]
        %v1727 = vld [vmem:[%s4 + $0x108] sm:$0xff]
        %v1728 = vld [vmem:[%s4 + $0x110] sm:$0xff]
        %v1729 = vld [vmem:[%s4 + $0x118] sm:$0xff]
        %v1730 = vld [vmem:[%s4 + $0x120] sm:$0xff]
        %v1731 = vld [vmem:[%s4 + $0x128] sm:$0xff]
        %v1732 = vld [vmem:[%s4 + $0x130] sm:$0xff]
        %v1733 = vld [vmem:[%s4 + $0x138] sm:$0xff]
        %v1734 = vld [vmem:[%s4 + $0x140] sm:$0xff]
        %v1735 = vld [vmem:[%s4 + $0x148] sm:$0xff]
        %v1736 = vld [vmem:[%s4 + $0x150] sm:$0xff]
        %v1737 = vld [vmem:[%s4 + $0x158] sm:$0xff]
        %v1738 = vld [vmem:[%s4 + $0x160] sm:$0xff]
        %v1739 = vld [vmem:[%s4 + $0x168] sm:$0xff]
        %v1740 = vld [vmem:[%s4 + $0x170] sm:$0xff]
        %v1741 = vld [vmem:[%s4 + $0x178] sm:$0xff]
        %v1742 = vpack.c.bf16 %v1682, %v1682
        %v1743 = vpack.c.bf16 %v1683, %v1683
        %v1744 = vpack.c.bf16 %v1684, %v1684
        %v1745 = vpack.c.bf16 %v1685, %v1685
        %v1746 = vpack.c.bf16 %v1686, %v1686
        %v1747 = vpack.c.bf16 %v1687, %v1687
        %v1796 = vunpack.c.l.b16 %v1694
        %v1797 = vunpack.c.h.b16 %v1694
        %v1798 = vunpack.c.l.b16 %v1695
        %v1799 = vunpack.c.h.b16 %v1695
        %v1800 = vunpack.c.l.b16 %v1696
        %v1801 = vunpack.c.h.b16 %v1696
        %v1802 = vunpack.c.l.b16 %v1697
        %v1803 = vunpack.c.h.b16 %v1697
        %v1804 = vunpack.c.l.b16 %v1698
        %v1805 = vunpack.c.h.b16 %v1698
        %v1806 = vunpack.c.l.b16 %v1699
        %v1807 = vunpack.c.h.b16 %v1699
        %v1808 = vunpack.c.l.b16 %v1700
        %v1809 = vunpack.c.h.b16 %v1700
        %v1810 = vunpack.c.l.b16 %v1701
        %v1811 = vunpack.c.h.b16 %v1701
        %v1812 = vunpack.c.l.b16 %v1702
        %v1813 = vunpack.c.h.b16 %v1702
        %v1814 = vunpack.c.l.b16 %v1703
        %v1815 = vunpack.c.h.b16 %v1703
        %v1816 = vunpack.c.l.b16 %v1704
        %v1817 = vunpack.c.h.b16 %v1704
        %v1818 = vunpack.c.l.b16 %v1705
        %v1819 = vunpack.c.h.b16 %v1705
        %v1820 = vunpack.c.l.b16 %v1706
        %v1821 = vunpack.c.h.b16 %v1706
        %v1822 = vunpack.c.l.b16 %v1707
        %v1823 = vunpack.c.h.b16 %v1707
        %v1824 = vunpack.c.l.b16 %v1708
        %v1825 = vunpack.c.h.b16 %v1708
        %v1826 = vunpack.c.l.b16 %v1709
        %v1827 = vunpack.c.h.b16 %v1709
        %v1828 = vunpack.c.l.b16 %v1710
        %v1829 = vunpack.c.h.b16 %v1710
        %v1830 = vunpack.c.l.b16 %v1711
        %v1831 = vunpack.c.h.b16 %v1711
        %v1832 = vunpack.c.l.b16 %v1712
        %v1833 = vunpack.c.h.b16 %v1712
        %v1834 = vunpack.c.l.b16 %v1713
        %v1835 = vunpack.c.h.b16 %v1713
        %v1836 = vunpack.c.l.b16 %v1714
        %v1837 = vunpack.c.h.b16 %v1714
        %v1838 = vunpack.c.l.b16 %v1715
        %v1839 = vunpack.c.h.b16 %v1715
        %v1840 = vunpack.c.l.b16 %v1716
        %v1841 = vunpack.c.h.b16 %v1716
        %v1842 = vunpack.c.l.b16 %v1717
        %v1843 = vunpack.c.h.b16 %v1717
        %v1844 = vunpack.c.l.b16 %v1718
        %v1845 = vunpack.c.h.b16 %v1718
        %v1846 = vunpack.c.l.b16 %v1719
        %v1847 = vunpack.c.h.b16 %v1719
        %v1848 = vunpack.c.l.b16 %v1720
        %v1849 = vunpack.c.h.b16 %v1720
        %v1850 = vunpack.c.l.b16 %v1721
        %v1851 = vunpack.c.h.b16 %v1721
        %v1852 = vunpack.c.l.b16 %v1722
        %v1853 = vunpack.c.h.b16 %v1722
        %v1854 = vunpack.c.l.b16 %v1723
        %v1855 = vunpack.c.h.b16 %v1723
        %v1856 = vunpack.c.l.b16 %v1724
        %v1857 = vunpack.c.h.b16 %v1724
        %v1858 = vunpack.c.l.b16 %v1725
        %v1859 = vunpack.c.h.b16 %v1725
        %v1860 = vunpack.c.l.b16 %v1726
        %v1861 = vunpack.c.h.b16 %v1726
        %v1862 = vunpack.c.l.b16 %v1727
        %v1863 = vunpack.c.h.b16 %v1727
        %v1864 = vunpack.c.l.b16 %v1728
        %v1865 = vunpack.c.h.b16 %v1728
        %v1866 = vunpack.c.l.b16 %v1729
        %v1867 = vunpack.c.h.b16 %v1729
        %v1868 = vunpack.c.l.b16 %v1730
        %v1869 = vunpack.c.h.b16 %v1730
        %v1870 = vunpack.c.l.b16 %v1731
        %v1871 = vunpack.c.h.b16 %v1731
        %v1872 = vunpack.c.l.b16 %v1732
        %v1873 = vunpack.c.h.b16 %v1732
        %v1874 = vunpack.c.l.b16 %v1733
        %v1875 = vunpack.c.h.b16 %v1733
        %v1876 = vunpack.c.l.b16 %v1734
        %v1877 = vunpack.c.h.b16 %v1734
        %v1878 = vunpack.c.l.b16 %v1735
        %v1879 = vunpack.c.h.b16 %v1735
        %v1880 = vunpack.c.l.b16 %v1736
        %v1881 = vunpack.c.h.b16 %v1736
        %v1882 = vunpack.c.l.b16 %v1737
        %v1883 = vunpack.c.h.b16 %v1737
        %v1884 = vunpack.c.l.b16 %v1738
        %v1885 = vunpack.c.h.b16 %v1738
        %v1886 = vunpack.c.l.b16 %v1739
        %v1887 = vunpack.c.h.b16 %v1739
        %v1888 = vunpack.c.l.b16 %v1740
        %v1889 = vunpack.c.h.b16 %v1740
        %v1890 = vunpack.c.l.b16 %v1741
        %v1891 = vunpack.c.h.b16 %v1741
        %v1892 = vpack.c.b16 %v1802, %v1796
        %v1893 = vpack.c.b16 %v1803, %v1797
        %v1894 = vpack.c.b16 %v1804, %v1798
        %v1895 = vpack.c.b16 %v1805, %v1799
        %v1896 = vpack.c.b16 %v1806, %v1800
        %v1897 = vpack.c.b16 %v1807, %v1801
        %v1898 = vpack.c.b16 %v1814, %v1808
        %v1899 = vpack.c.b16 %v1815, %v1809
        %v1900 = vpack.c.b16 %v1816, %v1810
        %v1901 = vpack.c.b16 %v1817, %v1811
        %v1902 = vpack.c.b16 %v1818, %v1812
        %v1903 = vpack.c.b16 %v1819, %v1813
        %v1904 = vpack.c.b16 %v1826, %v1820
        %v1905 = vpack.c.b16 %v1827, %v1821
        %v1906 = vpack.c.b16 %v1828, %v1822
        %v1907 = vpack.c.b16 %v1829, %v1823
        %v1908 = vpack.c.b16 %v1830, %v1824
        %v1909 = vpack.c.b16 %v1831, %v1825
        %v1910 = vpack.c.b16 %v1838, %v1832
        %v1911 = vpack.c.b16 %v1839, %v1833
        %v1912 = vpack.c.b16 %v1840, %v1834
        %v1913 = vpack.c.b16 %v1841, %v1835
        %v1914 = vpack.c.b16 %v1842, %v1836
        %v1915 = vpack.c.b16 %v1843, %v1837
        %v1916 = vpack.c.b16 %v1850, %v1844
        %v1917 = vpack.c.b16 %v1851, %v1845
        %v1918 = vpack.c.b16 %v1852, %v1846
        %v1919 = vpack.c.b16 %v1853, %v1847
        %v1920 = vpack.c.b16 %v1854, %v1848
        %v1921 = vpack.c.b16 %v1855, %v1849
        %v1922 = vpack.c.b16 %v1862, %v1856
        %v1923 = vpack.c.b16 %v1863, %v1857
        %v1924 = vpack.c.b16 %v1864, %v1858
        %v1925 = vpack.c.b16 %v1865, %v1859
        %v1926 = vpack.c.b16 %v1866, %v1860
        %v1927 = vpack.c.b16 %v1867, %v1861
        %v1928 = vpack.c.b16 %v1874, %v1868
        %v1929 = vpack.c.b16 %v1875, %v1869
        %v1930 = vpack.c.b16 %v1876, %v1870
        %v1931 = vpack.c.b16 %v1877, %v1871
        %v1932 = vpack.c.b16 %v1878, %v1872
        %v1933 = vpack.c.b16 %v1879, %v1873
        %v1934 = vpack.c.b16 %v1886, %v1880
        %v1935 = vpack.c.b16 %v1887, %v1881
        %v1936 = vpack.c.b16 %v1888, %v1882
        %v1937 = vpack.c.b16 %v1889, %v1883
        %v1938 = vpack.c.b16 %v1890, %v1884
        %v1939 = vpack.c.b16 %v1891, %v1885
        %1988 = vmatpush.bf16.xpose.msra.mxu0 0
        %1989 = vmatpush.bf16.xpose.msra.mxu0 0
        %1990 = vmatpush.bf16.xpose.msra.mxu0 0
        %1991 = vmatpush.bf16.xpose.msra.mxu0 0
        %1992 = vmatpush.bf16.xpose.msra.mxu0 0
        %1993 = vmatpush.bf16.xpose.msra.mxu0 0
        %1994 = vmatpush.bf16.xpose.msra.mxu0 0
        %1995 = vmatpush.bf16.xpose.msra.mxu0 %v1742
        %1996 = vmatmul.bf16.gmra.mxu0 %v1892
        %v1997 = vpop.f32.mrf.mxu0
        %v1998 = vadd.f32 0.0, %v1997
        %v1999 = vpop.f32.mrf.mxu0
        %v2000 = vadd.f32 0.0, %v1999
        %2001 = vmatmul.bf16.gmra.mxu0 %v1898
        %v2002 = vpop.f32.mrf.mxu0
        %v2003 = vadd.f32 0.0, %v2002
        %v2004 = vpop.f32.mrf.mxu0
        %v2005 = vadd.f32 0.0, %v2004
        %2006 = vmatmul.bf16.gmra.mxu0 %v1904
        %v2007 = vpop.f32.mrf.mxu0
        %v2008 = vadd.f32 0.0, %v2007
        %v2009 = vpop.f32.mrf.mxu0
        %v2010 = vadd.f32 0.0, %v2009
        %2011 = vmatmul.bf16.gmra.mxu0 %v1910
        %v2012 = vpop.f32.mrf.mxu0
        %v2013 = vadd.f32 0.0, %v2012
        %v2014 = vpop.f32.mrf.mxu0
        %v2015 = vadd.f32 0.0, %v2014
        %2016 = vmatmul.bf16.gmra.mxu0 %v1916
        %v2017 = vpop.f32.mrf.mxu0
        %v2018 = vadd.f32 0.0, %v2017
        %v2019 = vpop.f32.mrf.mxu0
        %v2020 = vadd.f32 0.0, %v2019
        %2021 = vmatmul.bf16.gmra.mxu0 %v1922
        %v2022 = vpop.f32.mrf.mxu0
        %v2023 = vadd.f32 0.0, %v2022
        %v2024 = vpop.f32.mrf.mxu0
        %v2025 = vadd.f32 0.0, %v2024
        %2026 = vmatmul.bf16.gmra.mxu0 %v1928
        %v2027 = vpop.f32.mrf.mxu0
        %v2028 = vadd.f32 0.0, %v2027
        %v2029 = vpop.f32.mrf.mxu0
        %v2030 = vadd.f32 0.0, %v2029
        %2031 = vmatmul.bf16.gmra.mxu0 %v1934
        %v2032 = vpop.f32.mrf.mxu0
        %v2033 = vadd.f32 0.0, %v2032
        %v2034 = vpop.f32.mrf.mxu0
        %v2035 = vadd.f32 0.0, %v2034
        %2036 = vdwg.mxu0
        %2037 = vmatpush.bf16.xpose.msra.mxu0 0
        %2038 = vmatpush.bf16.xpose.msra.mxu0 0
        %2039 = vmatpush.bf16.xpose.msra.mxu0 0
        %2040 = vmatpush.bf16.xpose.msra.mxu0 0
        %2041 = vmatpush.bf16.xpose.msra.mxu0 0
        %2042 = vmatpush.bf16.xpose.msra.mxu0 0
        %2043 = vmatpush.bf16.xpose.msra.mxu0 0
        %2044 = vmatpush.bf16.xpose.msra.mxu0 %v1743
        %2045 = vmatmul.bf16.gmra.mxu0 %v1893
        %v2046 = vpop.f32.mrf.mxu0
        %v2047 = vadd.f32 %v1998, %v2046
        %v2048 = vpop.f32.mrf.mxu0
        %v2049 = vadd.f32 %v2000, %v2048
        %2050 = vmatmul.bf16.gmra.mxu0 %v1899
        %v2051 = vpop.f32.mrf.mxu0
        %v2052 = vadd.f32 %v2003, %v2051
        %v2053 = vpop.f32.mrf.mxu0
        %v2054 = vadd.f32 %v2005, %v2053
        %2055 = vmatmul.bf16.gmra.mxu0 %v1905
        %v2056 = vpop.f32.mrf.mxu0
        %v2057 = vadd.f32 %v2008, %v2056
        %v2058 = vpop.f32.mrf.mxu0
        %v2059 = vadd.f32 %v2010, %v2058
        %2060 = vmatmul.bf16.gmra.mxu0 %v1911
        %v2061 = vpop.f32.mrf.mxu0
        %v2062 = vadd.f32 %v2013, %v2061
        %v2063 = vpop.f32.mrf.mxu0
        %v2064 = vadd.f32 %v2015, %v2063
        %2065 = vmatmul.bf16.gmra.mxu0 %v1917
        %v2066 = vpop.f32.mrf.mxu0
        %v2067 = vadd.f32 %v2018, %v2066
        %v2068 = vpop.f32.mrf.mxu0
        %v2069 = vadd.f32 %v2020, %v2068
        %2070 = vmatmul.bf16.gmra.mxu0 %v1923
        %v2071 = vpop.f32.mrf.mxu0
        %v2072 = vadd.f32 %v2023, %v2071
        %v2073 = vpop.f32.mrf.mxu0
        %v2074 = vadd.f32 %v2025, %v2073
        %2075 = vmatmul.bf16.gmra.mxu0 %v1929
        %v2076 = vpop.f32.mrf.mxu0
        %v2077 = vadd.f32 %v2028, %v2076
        %v2078 = vpop.f32.mrf.mxu0
        %v2079 = vadd.f32 %v2030, %v2078
        %2080 = vmatmul.bf16.gmra.mxu0 %v1935
        %v2081 = vpop.f32.mrf.mxu0
        %v2082 = vadd.f32 %v2033, %v2081
        %v2083 = vpop.f32.mrf.mxu0
        %v2084 = vadd.f32 %v2035, %v2083
        %2085 = vdwg.mxu0
        %2086 = vmatpush.bf16.xpose.msra.mxu0 0
        %2087 = vmatpush.bf16.xpose.msra.mxu0 0
        %2088 = vmatpush.bf16.xpose.msra.mxu0 0
        %2089 = vmatpush.bf16.xpose.msra.mxu0 0
        %2090 = vmatpush.bf16.xpose.msra.mxu0 0
        %2091 = vmatpush.bf16.xpose.msra.mxu0 0
        %2092 = vmatpush.bf16.xpose.msra.mxu0 0
        %2093 = vmatpush.bf16.xpose.msra.mxu0 %v1744
        %2094 = vmatmul.bf16.gmra.mxu0 %v1894
        %v2095 = vpop.f32.mrf.mxu0
        %v2096 = vadd.f32 %v2047, %v2095
        %v2097 = vpop.f32.mrf.mxu0
        %v2098 = vadd.f32 %v2049, %v2097
        %2099 = vmatmul.bf16.gmra.mxu0 %v1900
        %v2100 = vpop.f32.mrf.mxu0
        %v2101 = vadd.f32 %v2052, %v2100
        %v2102 = vpop.f32.mrf.mxu0
        %v2103 = vadd.f32 %v2054, %v2102
        %2104 = vmatmul.bf16.gmra.mxu0 %v1906
        %v2105 = vpop.f32.mrf.mxu0
        %v2106 = vadd.f32 %v2057, %v2105
        %v2107 = vpop.f32.mrf.mxu0
        %v2108 = vadd.f32 %v2059, %v2107
        %2109 = vmatmul.bf16.gmra.mxu0 %v1912
        %v2110 = vpop.f32.mrf.mxu0
        %v2111 = vadd.f32 %v2062, %v2110
        %v2112 = vpop.f32.mrf.mxu0
        %v2113 = vadd.f32 %v2064, %v2112
        %2114 = vmatmul.bf16.gmra.mxu0 %v1918
        %v2115 = vpop.f32.mrf.mxu0
        %v2116 = vadd.f32 %v2067, %v2115
        %v2117 = vpop.f32.mrf.mxu0
        %v2118 = vadd.f32 %v2069, %v2117
        %2119 = vmatmul.bf16.gmra.mxu0 %v1924
        %v2120 = vpop.f32.mrf.mxu0
        %v2121 = vadd.f32 %v2072, %v2120
        %v2122 = vpop.f32.mrf.mxu0
        %v2123 = vadd.f32 %v2074, %v2122
        %2124 = vmatmul.bf16.gmra.mxu0 %v1930
        %v2125 = vpop.f32.mrf.mxu0
        %v2126 = vadd.f32 %v2077, %v2125
        %v2127 = vpop.f32.mrf.mxu0
        %v2128 = vadd.f32 %v2079, %v2127
        %2129 = vmatmul.bf16.gmra.mxu0 %v1936
        %v2130 = vpop.f32.mrf.mxu0
        %v2131 = vadd.f32 %v2082, %v2130
        %v2132 = vpop.f32.mrf.mxu0
        %v2133 = vadd.f32 %v2084, %v2132
        %2134 = vdwg.mxu0
        %2135 = vmatpush.bf16.xpose.msra.mxu0 0
        %2136 = vmatpush.bf16.xpose.msra.mxu0 0
        %2137 = vmatpush.bf16.xpose.msra.mxu0 0
        %2138 = vmatpush.bf16.xpose.msra.mxu0 0
        %2139 = vmatpush.bf16.xpose.msra.mxu0 0
        %2140 = vmatpush.bf16.xpose.msra.mxu0 0
        %2141 = vmatpush.bf16.xpose.msra.mxu0 0
        %2142 = vmatpush.bf16.xpose.msra.mxu0 %v1745
        %2143 = vmatmul.bf16.gmra.mxu0 %v1895
        %v2144 = vpop.f32.mrf.mxu0
        %v2145 = vadd.f32 %v2096, %v2144
        %v2146 = vpop.f32.mrf.mxu0
        %v2147 = vadd.f32 %v2098, %v2146
        %2148 = vmatmul.bf16.gmra.mxu0 %v1901
        %v2149 = vpop.f32.mrf.mxu0
        %v2150 = vadd.f32 %v2101, %v2149
        %v2151 = vpop.f32.mrf.mxu0
        %v2152 = vadd.f32 %v2103, %v2151
        %2153 = vmatmul.bf16.gmra.mxu0 %v1907
        %v2154 = vpop.f32.mrf.mxu0
        %v2155 = vadd.f32 %v2106, %v2154
        %v2156 = vpop.f32.mrf.mxu0
        %v2157 = vadd.f32 %v2108, %v2156
        %2158 = vmatmul.bf16.gmra.mxu0 %v1913
        %v2159 = vpop.f32.mrf.mxu0
        %v2160 = vadd.f32 %v2111, %v2159
        %v2161 = vpop.f32.mrf.mxu0
        %v2162 = vadd.f32 %v2113, %v2161
        %2163 = vmatmul.bf16.gmra.mxu0 %v1919
        %v2164 = vpop.f32.mrf.mxu0
        %v2165 = vadd.f32 %v2116, %v2164
        %v2166 = vpop.f32.mrf.mxu0
        %v2167 = vadd.f32 %v2118, %v2166
        %2168 = vmatmul.bf16.gmra.mxu0 %v1925
        %v2169 = vpop.f32.mrf.mxu0
        %v2170 = vadd.f32 %v2121, %v2169
        %v2171 = vpop.f32.mrf.mxu0
        %v2172 = vadd.f32 %v2123, %v2171
        %2173 = vmatmul.bf16.gmra.mxu0 %v1931
        %v2174 = vpop.f32.mrf.mxu0
        %v2175 = vadd.f32 %v2126, %v2174
        %v2176 = vpop.f32.mrf.mxu0
        %v2177 = vadd.f32 %v2128, %v2176
        %2178 = vmatmul.bf16.gmra.mxu0 %v1937
        %v2179 = vpop.f32.mrf.mxu0
        %v2180 = vadd.f32 %v2131, %v2179
        %v2181 = vpop.f32.mrf.mxu0
        %v2182 = vadd.f32 %v2133, %v2181
        %2183 = vdwg.mxu0
        %2184 = vmatpush.bf16.xpose.msra.mxu0 0
        %2185 = vmatpush.bf16.xpose.msra.mxu0 0
        %2186 = vmatpush.bf16.xpose.msra.mxu0 0
        %2187 = vmatpush.bf16.xpose.msra.mxu0 0
        %2188 = vmatpush.bf16.xpose.msra.mxu0 0
        %2189 = vmatpush.bf16.xpose.msra.mxu0 0
        %2190 = vmatpush.bf16.xpose.msra.mxu0 0
        %2191 = vmatpush.bf16.xpose.msra.mxu0 %v1746
        %2192 = vmatmul.bf16.gmra.mxu0 %v1896
        %v2193 = vpop.f32.mrf.mxu0
        %v2194 = vadd.f32 %v2145, %v2193
        %v2195 = vpop.f32.mrf.mxu0
        %v2196 = vadd.f32 %v2147, %v2195
        %2197 = vmatmul.bf16.gmra.mxu0 %v1902
        %v2198 = vpop.f32.mrf.mxu0
        %v2199 = vadd.f32 %v2150, %v2198
        %v2200 = vpop.f32.mrf.mxu0
        %v2201 = vadd.f32 %v2152, %v2200
        %2202 = vmatmul.bf16.gmra.mxu0 %v1908
        %v2203 = vpop.f32.mrf.mxu0
        %v2204 = vadd.f32 %v2155, %v2203
        %v2205 = vpop.f32.mrf.mxu0
        %v2206 = vadd.f32 %v2157, %v2205
        %2207 = vmatmul.bf16.gmra.mxu0 %v1914
        %v2208 = vpop.f32.mrf.mxu0
        %v2209 = vadd.f32 %v2160, %v2208
        %v2210 = vpop.f32.mrf.mxu0
        %v2211 = vadd.f32 %v2162, %v2210
        %2212 = vmatmul.bf16.gmra.mxu0 %v1920
        %v2213 = vpop.f32.mrf.mxu0
        %v2214 = vadd.f32 %v2165, %v2213
        %v2215 = vpop.f32.mrf.mxu0
        %v2216 = vadd.f32 %v2167, %v2215
        %2217 = vmatmul.bf16.gmra.mxu0 %v1926
        %v2218 = vpop.f32.mrf.mxu0
        %v2219 = vadd.f32 %v2170, %v2218
        %v2220 = vpop.f32.mrf.mxu0
        %v2221 = vadd.f32 %v2172, %v2220
        %2222 = vmatmul.bf16.gmra.mxu0 %v1932
        %v2223 = vpop.f32.mrf.mxu0
        %v2224 = vadd.f32 %v2175, %v2223
        %v2225 = vpop.f32.mrf.mxu0
        %v2226 = vadd.f32 %v2177, %v2225
        %2227 = vmatmul.bf16.gmra.mxu0 %v1938
        %v2228 = vpop.f32.mrf.mxu0
        %v2229 = vadd.f32 %v2180, %v2228
        %v2230 = vpop.f32.mrf.mxu0
        %v2231 = vadd.f32 %v2182, %v2230
        %2232 = vdwg.mxu0
        %2233 = vmatpush.bf16.xpose.msra.mxu0 0
        %2234 = vmatpush.bf16.xpose.msra.mxu0 0
        %2235 = vmatpush.bf16.xpose.msra.mxu0 0
        %2236 = vmatpush.bf16.xpose.msra.mxu0 0
        %2237 = vmatpush.bf16.xpose.msra.mxu0 0
        %2238 = vmatpush.bf16.xpose.msra.mxu0 0
        %2239 = vmatpush.bf16.xpose.msra.mxu0 0
        %2240 = vmatpush.bf16.xpose.msra.mxu0 %v1747
        %2241 = vmatmul.bf16.gmra.mxu0 %v1897
        %v2242 = vpop.f32.mrf.mxu0
        %v2243 = vadd.f32 %v2194, %v2242
        %v2244 = vpop.f32.mrf.mxu0
        %v2245 = vadd.f32 %v2196, %v2244
        %2246 = vmatmul.bf16.gmra.mxu0 %v1903
        %v2247 = vpop.f32.mrf.mxu0
        %v2248 = vadd.f32 %v2199, %v2247
        %v2249 = vpop.f32.mrf.mxu0
        %v2250 = vadd.f32 %v2201, %v2249
        %2251 = vmatmul.bf16.gmra.mxu0 %v1909
        %v2252 = vpop.f32.mrf.mxu0
        %v2253 = vadd.f32 %v2204, %v2252
        %v2254 = vpop.f32.mrf.mxu0
        %v2255 = vadd.f32 %v2206, %v2254
        %2256 = vmatmul.bf16.gmra.mxu0 %v1915
        %v2257 = vpop.f32.mrf.mxu0
        %v2258 = vadd.f32 %v2209, %v2257
        %v2259 = vpop.f32.mrf.mxu0
        %v2260 = vadd.f32 %v2211, %v2259
        %2261 = vmatmul.bf16.gmra.mxu0 %v1921
        %v2262 = vpop.f32.mrf.mxu0
        %v2263 = vadd.f32 %v2214, %v2262
        %v2264 = vpop.f32.mrf.mxu0
        %v2265 = vadd.f32 %v2216, %v2264
        %2266 = vmatmul.bf16.gmra.mxu0 %v1927
        %v2267 = vpop.f32.mrf.mxu0
        %v2268 = vadd.f32 %v2219, %v2267
        %v2269 = vpop.f32.mrf.mxu0
        %v2270 = vadd.f32 %v2221, %v2269
        %2271 = vmatmul.bf16.gmra.mxu0 %v1933
        %v2272 = vpop.f32.mrf.mxu0
        %v2273 = vadd.f32 %v2224, %v2272
        %v2274 = vpop.f32.mrf.mxu0
        %v2275 = vadd.f32 %v2226, %v2274
        %2276 = vmatmul.bf16.gmra.mxu0 %v1939
        %v2277 = vpop.f32.mrf.mxu0
        %v2278 = vadd.f32 %v2229, %v2277
        %v2279 = vpop.f32.mrf.mxu0
        %v2280 = vadd.f32 %v2231, %v2279
        %2281 = vdwg.mxu0
        %vm2282 = vcmask 64512
        %2283 = vst.msk [vmem:[%s298] sm:$0xff] %vm2282, %v2243
        %2284 = vst.msk [vmem:[%s298 + $0x8] sm:$0xff] %vm2282, %v2245
        %2285 = vst.msk [vmem:[%s298 + $0x10] sm:$0xff] %vm2282, %v2248
        %2286 = vst.msk [vmem:[%s298 + $0x18] sm:$0xff] %vm2282, %v2250
        %2287 = vst.msk [vmem:[%s298 + $0x20] sm:$0xff] %vm2282, %v2253
        %2288 = vst.msk [vmem:[%s298 + $0x28] sm:$0xff] %vm2282, %v2255
        %2289 = vst.msk [vmem:[%s298 + $0x30] sm:$0xff] %vm2282, %v2258
        %2290 = vst.msk [vmem:[%s298 + $0x38] sm:$0xff] %vm2282, %v2260
        %2291 = vst.msk [vmem:[%s298 + $0x40] sm:$0xff] %vm2282, %v2263
        %2292 = vst.msk [vmem:[%s298 + $0x48] sm:$0xff] %vm2282, %v2265
        %2293 = vst.msk [vmem:[%s298 + $0x50] sm:$0xff] %vm2282, %v2268
        %2294 = vst.msk [vmem:[%s298 + $0x58] sm:$0xff] %vm2282, %v2270
        %2295 = vst.msk [vmem:[%s298 + $0x60] sm:$0xff] %vm2282, %v2273
        %2296 = vst.msk [vmem:[%s298 + $0x68] sm:$0xff] %vm2282, %v2275
        %2297 = vst.msk [vmem:[%s298 + $0x70] sm:$0xff] %vm2282, %v2278
        %2298 = vst.msk [vmem:[%s298 + $0x78] sm:$0xff] %vm2282, %v2280
        %s2299 = sand.u32 %s155, 1
        %s2300 = scalar_lea.sflag [#allocation3], %s2299
        %s2301 = sand.u32 %s155, 1
        %s2302 = smul.addr %s2301, 48
        %s2303 = scalar_lea.vmem [#allocation2], %s2302
        %p2304 = scmp.lt.s32.totalorder %s25, 1
        %s2305 = scalar_select %p2304, %s25, 1
        %p2306 = scmp.lt.s32.totalorder %s26, 0
        %s2307 = scalar_select %p2306, %s26, 0
        %s2308 = smul.addr %s2305, 16
        %s2309 = sadd.s32 %s2307, %s2308
        %s2310 = smul.addr %s2309, 8
        %s2311 = scalar_lea.vmem %s6, %s2310
        // Predicated region
        $region41: #{tpu_custom_call.1} parent=39 // pred_check
          %p2312 = pneg %p165
        $region42: #{tpu_custom_call.1} parent=39 // pred_check_branch
          %2314 = sbr.rel (%p2312) target = $region44
        $region43: #{tpu_custom_call.1} parent=39 // pred_region
          %2316 = vsyncadd %s2300, 0
          %s2317 = smul.addr %s26, 6
          %s2318 = smul.addr %s25, 6
          %s2319 = sadd.s32 %s2317, %s2318
          %s2320 = smul.addr %s2319, 8
          %s2321 = scalar_lea.hbm %s5, %s2320
          %s2323 = sshll.u32 %s2303, 4
          %s2324 = int_to_ptr.vmem [resolvable:$true] %s2323
          %s2325 = sshll.u32 %s2321, 4
          %s2326 = int_to_ptr.hbm [resolvable:$true] %s2325
          %2328 = dma.vmem_to_hbm [thread:$0]  %s2324, 768, %s2326, %s2300
        $region44: #{tpu_custom_call.1} parent=39 // pred_fallthru
          _
        // Predicated region
        $region45: #{tpu_custom_call.1} parent=39 // pred_check
          %p2329 = pneg %p193
        $region46: #{tpu_custom_call.1} parent=39 // pred_check_branch
          %2331 = sbr.rel (%p2329) target = $region48
        $region47: #{tpu_custom_call.1} parent=39 // pred_region
          _
        $region48: #{tpu_custom_call.1} parent=39 // pred_fallthru
          _
      $region40: #{tpu_custom_call.1} parent=5 // pred_fallthru
        _
      %p2332 = scmp.le.s32.totalorder 2, %s16
      // Predicated region
      $region49: #{tpu_custom_call.1} parent=5 // pred_check
        %p2333 = pneg %p2332
      $region50: #{tpu_custom_call.1} parent=5 // pred_check_branch
        %2335 = sbr.rel (%p2333) target = $region52
      $region51: #{tpu_custom_call.1} parent=5 // pred_region
        %s2336 = ssub.s32 %s16, 2
        // Predicated region
        $region53: #{tpu_custom_call.1} parent=51 // pred_check
          %p2337 = pneg %p171
        $region54: #{tpu_custom_call.1} parent=51 // pred_check_branch
          %2339 = sbr.rel (%p2337) target = $region56
        $region55: #{tpu_custom_call.1} parent=51 // pred_region
          %s2340 = sand.u32 %s156, 1
          %s2341 = scalar_lea.sflag [#allocation3], %s2340
          %s2342 = sand.u32 %s156, 1
          %s2343 = smul.addr %s2342, 48
          %s2344 = scalar_lea.vmem [#allocation2], %s2343
          %2346 = dma.done %s2341, 768
        $region56: #{tpu_custom_call.1} parent=51 // pred_fallthru
          _
        // Predicated region
        $region57: #{tpu_custom_call.1} parent=51 // pred_check
          %p2347 = pneg %p199
        $region58: #{tpu_custom_call.1} parent=51 // pred_check_branch
          %2349 = sbr.rel (%p2347) target = $region60
        $region59: #{tpu_custom_call.1} parent=51 // pred_region
          %p2350 = scmp.lt.s32.totalorder %s27, 1
          %s2351 = scalar_select %p2350, %s27, 1
          %p2352 = scmp.lt.s32.totalorder %s28, 0
          %s2353 = scalar_select %p2352, %s28, 0
          %s2354 = smul.addr %s2351, 16
          %s2355 = sadd.s32 %s2353, %s2354
          %s2356 = smul.addr %s2355, 8
          %s2357 = scalar_lea.vmem %s6, %s2356
        $region60: #{tpu_custom_call.1} parent=51 // pred_fallthru
          _
      $region52: #{tpu_custom_call.1} parent=5 // pred_fallthru
        _
    $region6: #{tpu_custom_call.1} parent=1 // loop_footer
      %s20 = sadd.s32 1, %s16
    $region7: #{tpu_custom_call.1} parent=1 // loop_footer_branch
      %15 = sbr.rel target = $region3
    $region8: #{tpu_custom_call.1} parent=1 // loop_exit
      _
    %2358 = vsyncpa [#allocation3], 1
    %s2359 = scalar_lea.sflag [#allocation3], 1
    %2360 = vsyncpa %s2359, 1

</llo_original>
